<compile_context>
chip_gen: v6e
topology: v6e:2x2x1
jax: 0.10.0
libtpu: 0.0.40
codegen_flags: <defaults>
</compile_context>

<pallas_src>
import functools

import jax
import jax.numpy as jnp
from jax.experimental import pallas as pl
from jax.experimental.pallas import tpu as pltpu


NUM_CLASSES = 10
NUM_CLASSES_PAD = 128   # lane-dense padded logits width (sliced in wrapper)
BATCH_PAD = 8           # sublane-dense padded logits height (sliced in wrapper)


# --------------------------------------------------------------------------
# In-kernel helpers (traced inside the Pallas kernel)
# --------------------------------------------------------------------------
def _conv3x3_gn_relu(x_cf, masks, pool, w_packed, cbias, gamma, beta, *, h, w):
    """Fused 3x3 'same' conv + bias + GroupNorm(1 group) + ReLU, whole batch.

    x_cf:     (Cin,  N*HW) f32   channel-major, batch folded along lanes
    masks:    (9,    N*HW) f32   tap-validity masks (zero-padding emulation)
    pool:     (8,    N*HW) f32   row n = 1/HW on sample n's lanes, else 0
    w_packed: (Cout, 9*Cin) bf16 column index = tap*Cin + cin
    cbias/gamma/beta: (Cout, 1) f32
    returns:  (Cout, N*HW) f32
    """
    cin, nhw = x_cf.shape
    hw = h * w

    # Build the im2col patch in registers: 9 masked lane-rolls stacked along
    # sublanes, then ONE MXU matmul against the tap-fused weights.
    slabs = []
    k = 0
    for dh in (-1, 0, 1):
        for dw in (-1, 0, 1):
            delta = dh * w + dw
            shift = (-delta) % nhw
            shifted = pltpu.roll(x_cf, shift=shift, axis=1) if shift else x_cf
            slabs.append(shifted * masks[k:k + 1, :])
            k += 1
    patch = jnp.concatenate(slabs, axis=0).astype(jnp.bfloat16)    # (9*Cin, N*HW)
    y = jnp.dot(w_packed, patch,
                preferred_element_type=jnp.float32) + cbias        # (Cout, N*HW)

    # GroupNorm(num_groups=1): per-sample stats over (C, H, W), two-pass
    # variance.  Per-sample reduce + broadcast-back go through the pooling
    # matrix so everything stays 2-D and lane-dense (no in-kernel reshapes).
    cnd = (((1,), (1,)), ((), ()))                                  # contract lanes
    mu_s = jnp.mean(
        jax.lax.dot_general(y, pool, cnd, preferred_element_type=jnp.float32),
        axis=0, keepdims=True)                                      # (1, 8)
    mu = jnp.dot(mu_s, pool, preferred_element_type=jnp.float32) * hw   # (1, N*HW)
    yc = y - mu
    var_s = jnp.mean(
        jax.lax.dot_general(yc * yc, pool, cnd,
                            preferred_element_type=jnp.float32),
        axis=0, keepdims=True)
    var = jnp.dot(var_s, pool, preferred_element_type=jnp.float32) * hw
    y = yc * jax.lax.rsqrt(var + 1e-5)
    return jnp.maximum(y * gamma + beta, 0.0)


def _fused_forward_kernel(x_ref, aux_ref, w1_ref, w2_ref, whb_ref, cp_ref,
                          o_ref, *, h, w, c1, c2):
    """Whole batch: enc[0] -> enc[1] -> global-avg-pool -> linear head."""
    pool = aux_ref[0:8, :]            # (8, N*HW) pooling / segment matrix
    masks = aux_ref[8:17, :]          # (9, N*HW) 3x3 tap validity masks
    cp = cp_ref[...]                  # (16, 8)   packed per-channel params

    x = x_ref[...]                    # (Cin, N*HW) f32
    f1 = _conv3x3_gn_relu(x, masks, pool, w1_ref[...],
                          cp[:c1, 0:1], cp[:c1, 1:2], cp[:c1, 2:3], h=h, w=w)
    f2 = _conv3x3_gn_relu(f1, masks, pool, w2_ref[...],
                          cp[:c2, 3:4], cp[:c2, 4:5], cp[:c2, 5:6], h=h, w=w)

    # Head: global average pool as q@k^T against the pooling matrix, then the
    # Linear layer.  Output is an (8, 128) dense block (unmasked store).
    pooled = jax.lax.dot_general(pool, f2, (((1,), (1,)), ((), ())),
                                 preferred_element_type=jnp.float32)   # (8, C2)
    wh = whb_ref[0:c2, :]             # (C2, 128) head weight (class padded)
    bh = whb_ref[c2:c2 + 1, :]        # (1, 128)  head bias
    o_ref[...] = jnp.dot(pooled, wh, preferred_element_type=jnp.float32) + bh


# --------------------------------------------------------------------------
# Wrapper: packs parameters into lane-friendly layouts, one gridless call
# --------------------------------------------------------------------------
@functools.partial(jax.jit, static_argnames=("num_classes",))
def single_submodel_forward(x_nchw,
                            enc_w0, enc_cb0, enc_g0, enc_b0,
                            enc_w1, enc_cb1, enc_g1, enc_b1,
                            w_head, b_head, num_classes=NUM_CLASSES):
    n, cin, h, w = x_nchw.shape
    hw = h * w
    nhw = n * hw
    c1 = enc_w0.shape[-1]
    c2 = enc_w1.shape[-1]
    # TODO(synk): batches > 8 would add a grid over groups of <=8 samples and
    # large H*W would tile the spatial (lane) axis with a 1-row halo.
    assert n <= BATCH_PAD, "single-step kernel handles up to 8 samples"

    # Channel-major activations with the batch folded into lanes: (Cin, N*HW).
    x_cf = jnp.transpose(x_nchw.reshape(n, cin, hw).astype(jnp.float32),
                         (1, 0, 2)).reshape(cin, nhw)

    # Host-side constants: 3x3 tap validity masks (zero padding) tiled over the
    # batch, and the per-sample global-average-pool matrix.  Packed into one
    # auxiliary input to keep the number of DMA streams small.
    hh = jnp.arange(h)
    ww = jnp.arange(w)
    mask_rows = []
    for dh in (-1, 0, 1):
        for dw in (-1, 0, 1):
            row_ok = (hh + dh >= 0) & (hh + dh < h)
            col_ok = (ww + dw >= 0) & (ww + dw < w)
            mask_rows.append((row_ok[:, None] & col_ok[None, :]).reshape(hw))
    masks = jnp.tile(jnp.stack(mask_rows, 0).astype(jnp.float32), (1, n))
    pool = jnp.zeros((BATCH_PAD, nhw), jnp.float32)
    for i in range(n):
        pool = pool.at[i, i * hw:(i + 1) * hw].set(1.0 / hw)
    aux = jnp.concatenate([pool, masks], axis=0)              # (17, N*HW)

    def pack_conv(wk):  # (3,3,ci,co) -> (co, 9*ci), col = (kh*3+kw)*ci + c
        _, _, ci, co = wk.shape
        return jnp.transpose(wk.reshape(9, ci, co), (2, 0, 1)).reshape(co, 9 * ci)

    w1 = pack_conv(enc_w0).astype(jnp.bfloat16)               # (C1, 9*Cin)
    w2 = pack_conv(enc_w1).astype(jnp.bfloat16)               # (C2, 9*C1)

    ncp = NUM_CLASSES_PAD
    whb = jnp.zeros((c2 + 1, ncp), jnp.float32)
    whb = whb.at[:c2, :num_classes].set(w_head)               # head weight
    whb = whb.at[c2, :num_classes].set(b_head)                # head bias row

    # Per-channel params packed as columns: [cb1, g1, b1, cb2, g2, b2, 0, 0].
    cp = jnp.zeros((max(c1, c2, 8), 8), jnp.float32)
    cp = cp.at[:c1, 0].set(enc_cb0)
    cp = cp.at[:c1, 1].set(enc_g0)
    cp = cp.at[:c1, 2].set(enc_b0)
    cp = cp.at[:c2, 3].set(enc_cb1)
    cp = cp.at[:c2, 4].set(enc_g1)
    cp = cp.at[:c2, 5].set(enc_b1)

    kernel = functools.partial(_fused_forward_kernel, h=h, w=w, c1=c1, c2=c2)

    # Gridless call: every operand is tiny, lives whole in VMEM (default
    # full-array BlockSpecs), and the kernel runs exactly once per batch.
    out = pl.pallas_call(
        kernel,
        out_shape=jax.ShapeDtypeStruct((BATCH_PAD, ncp), jnp.float32),
    )(x_cf, aux, w1, w2, whb, cp)

    # TODO(synk): only the default (verbose=False) forward path is produced;
    # verbose=True would additionally return the intermediate feats list.
    return out[:n, :num_classes]


# --------------------------------------------------------------------------
# Parameter init mirroring the module's __init__
# --------------------------------------------------------------------------
def init_params(key, cin=4, channels=(8, 16), num_classes=NUM_CLASSES):
    """kaiming_normal(fan_out, relu) for Conv2d, weight=1/bias=0 for norms."""
    enc_params = []
    c_prev = cin
    for c_out in channels:
        key, kw_key, kb_key = jax.random.split(key, 3)
        std = (2.0 / (c_out * 9)) ** 0.5
        wk = std * jax.random.normal(kw_key, (3, 3, c_prev, c_out), jnp.float32)
        bbound = 1.0 / ((c_prev * 9) ** 0.5)
        cb = jax.random.uniform(kb_key, (c_out,), jnp.float32, -bbound, bbound)
        gamma = jnp.ones((c_out,), jnp.float32)
        beta = jnp.zeros((c_out,), jnp.float32)
        enc_params.append((wk, cb, gamma, beta))
        c_prev = c_out
    key, s1, s2 = jax.random.split(key, 3)
    bound = 1.0 / (c_prev ** 0.5)
    w_head = jax.random.uniform(s1, (c_prev, num_classes), jnp.float32,
                                -bound, bound)
    b_head = jax.random.uniform(s2, (num_classes,), jnp.float32, -bound, bound)
    return enc_params, w_head, b_head


# --------------------------------------------------------------------------
# Pure-JAX reference (same math) for a sanity check
# --------------------------------------------------------------------------
def im2col_3x3(x_nhwc):
    n, h, w, c = x_nhwc.shape
    xp = jnp.pad(x_nhwc, ((0, 0), (1, 1), (1, 1), (0, 0)))
    cols = []
    for dh in range(3):
        for dw in range(3):
            cols.append(xp[:, dh:dh + h, dw:dw + w, :])
    return jnp.concatenate(cols, axis=-1)


def reference_forward(x_nchw, enc_params, w_head, b_head):
    out = jnp.transpose(x_nchw, (0, 2, 3, 1))
    for (wk, cb, gamma, beta) in enc_params:
        n, h, wdim, cin = out.shape
        cout = wk.shape[-1]
        p = im2col_3x3(out).reshape(n, h * wdim, 9 * cin)
        y = p @ wk.reshape(9 * cin, cout) + cb[None, None, :]
        mu = jnp.mean(y, axis=(1, 2), keepdims=True)
        var = jnp.mean((y - mu) ** 2, axis=(1, 2), keepdims=True)
        y = (y - mu) / jnp.sqrt(var + 1e-5)
        y = jnp.maximum(y * gamma[None, None, :] + beta[None, None, :], 0.0)
        out = y.reshape(n, h, wdim, cout)
    pooled = jnp.mean(out, axis=(1, 2))
    return pooled @ w_head + b_head[None, :]


if __name__ == "__main__":
    key = jax.random.PRNGKey(0)
    key_x, key_p = jax.random.split(key)

    # Small shapes consistent with a conv encoder: NCHW input (2, 4, 16, 16).
    x = jax.random.normal(key_x, (2, 4, 16, 16), jnp.float32)
    enc_params, w_head, b_head = init_params(key_p)
    (w0, cb0, g0, b0), (w1, cb1, g1, b1) = enc_params

    logits = single_submodel_forward(
        x, w0, cb0, g0, b0, w1, cb1, g1, b1, w_head, b_head)
    logits = jax.block_until_ready(logits)

    ref = reference_forward(x, enc_params, w_head, b_head)
    assert logits.shape == (2, NUM_CLASSES)
    max_err = float(jnp.max(jnp.abs(logits - ref)))
    # bf16 conv-matmul operands (f32 accumulation) -> a few 1e-3 of drift.
    assert jnp.allclose(logits, ref, atol=3e-2, rtol=3e-2), (
        f"Pallas output mismatch vs reference (max abs err {max_err})")

    print("KERNEL_OK")
</pallas_src>

<mosaic_0001>
module attributes {stable_mosaic.version = 11 : i64} {
  func.func @_fused_forward_kernel(%arg0: memref<4x512xf32, #tpu.memory_space<vmem>>, %arg1: memref<17x512xf32, #tpu.memory_space<vmem>>, %arg2: memref<8x36xbf16, #tpu.memory_space<vmem>>, %arg3: memref<16x72xbf16, #tpu.memory_space<vmem>>, %arg4: memref<17x128xf32, #tpu.memory_space<vmem>>, %arg5: memref<16x8xf32, #tpu.memory_space<vmem>>, %arg6: memref<8x128xf32, #tpu.memory_space<vmem>>) attributes {dimension_semantics = [], scalar_prefetch = 0 : i64, scratch_operands = 0 : i64, tpu.core_type = #tpu.core_type<tc>} {
    %c0 = arith.constant 0 : index
    %c0_0 = arith.constant 0 : index
    %0 = vector.load %arg1[%c0, %c0_0] : memref<17x512xf32, #tpu.memory_space<vmem>>, vector<8x512xf32>
    %c8 = arith.constant 8 : index
    %c0_1 = arith.constant 0 : index
    %1 = vector.load %arg1[%c8, %c0_1] : memref<17x512xf32, #tpu.memory_space<vmem>>, vector<9x512xf32>
    %c0_2 = arith.constant 0 : index
    %c0_3 = arith.constant 0 : index
    %2 = vector.load %arg5[%c0_2, %c0_3] : memref<16x8xf32, #tpu.memory_space<vmem>>, vector<16x8xf32>
    %c0_4 = arith.constant 0 : index
    %c0_5 = arith.constant 0 : index
    %3 = vector.load %arg0[%c0_4, %c0_5] : memref<4x512xf32, #tpu.memory_space<vmem>>, vector<4x512xf32>
    %c0_6 = arith.constant 0 : index
    %c0_7 = arith.constant 0 : index
    %4 = vector.load %arg2[%c0_6, %c0_7] : memref<8x36xbf16, #tpu.memory_space<vmem>>, vector<8x36xbf16>
    %5 = vector.extract_strided_slice %2 {offsets = [0, 0], sizes = [8, 1], strides = [1, 1]} : vector<16x8xf32> to vector<8x1xf32>
    %6 = vector.extract_strided_slice %2 {offsets = [0, 1], sizes = [8, 1], strides = [1, 1]} : vector<16x8xf32> to vector<8x1xf32>
    %7 = vector.extract_strided_slice %2 {offsets = [0, 2], sizes = [8, 1], strides = [1, 1]} : vector<16x8xf32> to vector<8x1xf32>
    %c17_i32 = arith.constant 17 : i32
    %8 = tpu.dynamic_rotate %3 by %c17_i32 dim 1 : vector<4x512xf32>, i32 -> vector<4x512xf32>
    %9 = vector.extract_strided_slice %1 {offsets = [0, 0], sizes = [1, 512], strides = [1, 1]} : vector<9x512xf32> to vector<1x512xf32>
    %10 = vector.broadcast %9 : vector<1x512xf32> to vector<4x512xf32>
    %11 = arith.mulf %8, %10 : vector<4x512xf32>
    %c16_i32 = arith.constant 16 : i32
    %12 = tpu.dynamic_rotate %3 by %c16_i32 dim 1 : vector<4x512xf32>, i32 -> vector<4x512xf32>
    %13 = vector.extract_strided_slice %1 {offsets = [1, 0], sizes = [1, 512], strides = [1, 1]} : vector<9x512xf32> to vector<1x512xf32>
    %14 = vector.broadcast %13 : vector<1x512xf32> to vector<4x512xf32>
    %15 = arith.mulf %12, %14 : vector<4x512xf32>
    %c15_i32 = arith.constant 15 : i32
    %16 = tpu.dynamic_rotate %3 by %c15_i32 dim 1 : vector<4x512xf32>, i32 -> vector<4x512xf32>
    %17 = vector.extract_strided_slice %1 {offsets = [2, 0], sizes = [1, 512], strides = [1, 1]} : vector<9x512xf32> to vector<1x512xf32>
    %18 = vector.broadcast %17 : vector<1x512xf32> to vector<4x512xf32>
    %19 = arith.mulf %16, %18 : vector<4x512xf32>
    %c1_i32 = arith.constant 1 : i32
    %20 = tpu.dynamic_rotate %3 by %c1_i32 dim 1 : vector<4x512xf32>, i32 -> vector<4x512xf32>
    %21 = vector.extract_strided_slice %1 {offsets = [3, 0], sizes = [1, 512], strides = [1, 1]} : vector<9x512xf32> to vector<1x512xf32>
    %22 = vector.broadcast %21 : vector<1x512xf32> to vector<4x512xf32>
    %23 = arith.mulf %20, %22 : vector<4x512xf32>
    %24 = vector.extract_strided_slice %1 {offsets = [4, 0], sizes = [1, 512], strides = [1, 1]} : vector<9x512xf32> to vector<1x512xf32>
    %25 = vector.broadcast %24 : vector<1x512xf32> to vector<4x512xf32>
    %26 = arith.mulf %3, %25 : vector<4x512xf32>
    %c511_i32 = arith.constant 511 : i32
    %27 = tpu.dynamic_rotate %3 by %c511_i32 dim 1 : vector<4x512xf32>, i32 -> vector<4x512xf32>
    %28 = vector.extract_strided_slice %1 {offsets = [5, 0], sizes = [1, 512], strides = [1, 1]} : vector<9x512xf32> to vector<1x512xf32>
    %29 = vector.broadcast %28 : vector<1x512xf32> to vector<4x512xf32>
    %30 = arith.mulf %27, %29 : vector<4x512xf32>
    %c497_i32 = arith.constant 497 : i32
    %31 = tpu.dynamic_rotate %3 by %c497_i32 dim 1 : vector<4x512xf32>, i32 -> vector<4x512xf32>
    %32 = vector.extract_strided_slice %1 {offsets = [6, 0], sizes = [1, 512], strides = [1, 1]} : vector<9x512xf32> to vector<1x512xf32>
    %33 = vector.broadcast %32 : vector<1x512xf32> to vector<4x512xf32>
    %34 = arith.mulf %31, %33 : vector<4x512xf32>
    %c496_i32 = arith.constant 496 : i32
    %35 = tpu.dynamic_rotate %3 by %c496_i32 dim 1 : vector<4x512xf32>, i32 -> vector<4x512xf32>
    %36 = vector.extract_strided_slice %1 {offsets = [7, 0], sizes = [1, 512], strides = [1, 1]} : vector<9x512xf32> to vector<1x512xf32>
    %37 = vector.broadcast %36 : vector<1x512xf32> to vector<4x512xf32>
    %38 = arith.mulf %35, %37 : vector<4x512xf32>
    %c495_i32 = arith.constant 495 : i32
    %39 = tpu.dynamic_rotate %3 by %c495_i32 dim 1 : vector<4x512xf32>, i32 -> vector<4x512xf32>
    %40 = vector.extract_strided_slice %1 {offsets = [8, 0], sizes = [1, 512], strides = [1, 1]} : vector<9x512xf32> to vector<1x512xf32>
    %41 = vector.broadcast %40 : vector<1x512xf32> to vector<4x512xf32>
    %42 = arith.mulf %39, %41 : vector<4x512xf32>
    %43 = tpu.concatenate %11, %15, %19, %23, %26, %30, %34, %38, %42 in 0 : vector<4x512xf32>, vector<4x512xf32>, vector<4x512xf32>, vector<4x512xf32>, vector<4x512xf32>, vector<4x512xf32>, vector<4x512xf32>, vector<4x512xf32>, vector<4x512xf32> -> vector<36x512xf32>
    %44 = arith.truncf %43 : vector<36x512xf32> to vector<36x512xbf16>
    %cst = arith.constant dense<0.000000e+00> : vector<8x512xf32>
    %45 = tpu.matmul %4, %44, %cst {dimension_numbers = #tpu.dot_dimension_numbers<[1], [0], [0], [1], [0, 0, 1, 1], [], []>} : vector<8x36xbf16>, vector<36x512xbf16>, vector<8x512xf32> -> vector<8x512xf32>
    %46 = vector.broadcast %5 : vector<8x1xf32> to vector<8x512xf32>
    %47 = arith.addf %45, %46 : vector<8x512xf32>
    %cst_8 = arith.constant dense<0.000000e+00> : vector<8x8xf32>
    %48 = tpu.matmul %47, %0, %cst_8 {dimension_numbers = #tpu.dot_dimension_numbers<[1], [1], [0], [0], [0, 0, 1, 0], [], []>} : vector<8x512xf32>, vector<8x512xf32>, vector<8x8xf32> -> vector<8x8xf32>
    %cst_9 = arith.constant dense<0.000000e+00> : vector<8xf32>
    %49 = vector.multi_reduction <add>, %48, %cst_9 [0] : vector<8x8xf32> to vector<8xf32>
    %50 = vector.shape_cast %49 : vector<8xf32> to vector<1x8xf32>
    %cst_10 = arith.constant 8.000000e+00 : f32
    %51 = vector.broadcast %cst_10 : f32 to vector<1x8xf32>
    %52 = arith.divf %50, %51 : vector<1x8xf32>
    %cst_11 = arith.constant dense<0.000000e+00> : vector<1x512xf32>
    %53 = tpu.matmul %52, %0, %cst_11 {dimension_numbers = #tpu.dot_dimension_numbers<[1], [0], [0], [1], [0, 0, 1, 1], [], []>} : vector<1x8xf32>, vector<8x512xf32>, vector<1x512xf32> -> vector<1x512xf32>
    %cst_12 = arith.constant 2.560000e+02 : f32
    %54 = vector.broadcast %cst_12 : f32 to vector<1x512xf32>
    %55 = arith.mulf %53, %54 : vector<1x512xf32>
    %56 = vector.broadcast %55 : vector<1x512xf32> to vector<8x512xf32>
    %57 = arith.subf %47, %56 : vector<8x512xf32>
    %58 = arith.mulf %57, %57 : vector<8x512xf32>
    %cst_13 = arith.constant dense<0.000000e+00> : vector<8x8xf32>
    %59 = tpu.matmul %58, %0, %cst_13 {dimension_numbers = #tpu.dot_dimension_numbers<[1], [1], [0], [0], [0, 0, 1, 0], [], []>} : vector<8x512xf32>, vector<8x512xf32>, vector<8x8xf32> -> vector<8x8xf32>
    %cst_14 = arith.constant dense<0.000000e+00> : vector<8xf32>
    %60 = vector.multi_reduction <add>, %59, %cst_14 [0] : vector<8x8xf32> to vector<8xf32>
    %61 = vector.shape_cast %60 : vector<8xf32> to vector<1x8xf32>
    %cst_15 = arith.constant 8.000000e+00 : f32
    %62 = vector.broadcast %cst_15 : f32 to vector<1x8xf32>
    %63 = arith.divf %61, %62 : vector<1x8xf32>
    %cst_16 = arith.constant dense<0.000000e+00> : vector<1x512xf32>
    %64 = tpu.matmul %63, %0, %cst_16 {dimension_numbers = #tpu.dot_dimension_numbers<[1], [0], [0], [1], [0, 0, 1, 1], [], []>} : vector<1x8xf32>, vector<8x512xf32>, vector<1x512xf32> -> vector<1x512xf32>
    %cst_17 = arith.constant 2.560000e+02 : f32
    %65 = vector.broadcast %cst_17 : f32 to vector<1x512xf32>
    %66 = arith.mulf %64, %65 : vector<1x512xf32>
    %cst_18 = arith.constant 9.99999974E-6 : f32
    %67 = vector.broadcast %cst_18 : f32 to vector<1x512xf32>
    %68 = arith.addf %66, %67 : vector<1x512xf32>
    %69 = math.rsqrt %68 : vector<1x512xf32>
    %70 = vector.broadcast %69 : vector<1x512xf32> to vector<8x512xf32>
    %71 = arith.mulf %57, %70 : vector<8x512xf32>
    %72 = vector.broadcast %6 : vector<8x1xf32> to vector<8x512xf32>
    %73 = arith.mulf %71, %72 : vector<8x512xf32>
    %74 = vector.broadcast %7 : vector<8x1xf32> to vector<8x512xf32>
    %75 = arith.addf %73, %74 : vector<8x512xf32>
    %cst_19 = arith.constant 0.000000e+00 : f32
    %76 = vector.broadcast %cst_19 : f32 to vector<8x512xf32>
    %77 = arith.maximumf %75, %76 : vector<8x512xf32>
    %c0_20 = arith.constant 0 : index
    %c0_21 = arith.constant 0 : index
    %78 = vector.load %arg3[%c0_20, %c0_21] : memref<16x72xbf16, #tpu.memory_space<vmem>>, vector<16x72xbf16>
    %79 = vector.extract_strided_slice %2 {offsets = [0, 3], sizes = [16, 1], strides = [1, 1]} : vector<16x8xf32> to vector<16x1xf32>
    %80 = vector.extract_strided_slice %2 {offsets = [0, 4], sizes = [16, 1], strides = [1, 1]} : vector<16x8xf32> to vector<16x1xf32>
    %81 = vector.extract_strided_slice %2 {offsets = [0, 5], sizes = [16, 1], strides = [1, 1]} : vector<16x8xf32> to vector<16x1xf32>
    %c17_i32_22 = arith.constant 17 : i32
    %82 = tpu.dynamic_rotate %77 by %c17_i32_22 dim 1 : vector<8x512xf32>, i32 -> vector<8x512xf32>
    %83 = vector.extract_strided_slice %1 {offsets = [0, 0], sizes = [1, 512], strides = [1, 1]} : vector<9x512xf32> to vector<1x512xf32>
    %84 = vector.broadcast %83 : vector<1x512xf32> to vector<8x512xf32>
    %85 = arith.mulf %82, %84 : vector<8x512xf32>
    %c16_i32_23 = arith.constant 16 : i32
    %86 = tpu.dynamic_rotate %77 by %c16_i32_23 dim 1 : vector<8x512xf32>, i32 -> vector<8x512xf32>
    %87 = vector.extract_strided_slice %1 {offsets = [1, 0], sizes = [1, 512], strides = [1, 1]} : vector<9x512xf32> to vector<1x512xf32>
    %88 = vector.broadcast %87 : vector<1x512xf32> to vector<8x512xf32>
    %89 = arith.mulf %86, %88 : vector<8x512xf32>
    %c15_i32_24 = arith.constant 15 : i32
    %90 = tpu.dynamic_rotate %77 by %c15_i32_24 dim 1 : vector<8x512xf32>, i32 -> vector<8x512xf32>
    %91 = vector.extract_strided_slice %1 {offsets = [2, 0], sizes = [1, 512], strides = [1, 1]} : vector<9x512xf32> to vector<1x512xf32>
    %92 = vector.broadcast %91 : vector<1x512xf32> to vector<8x512xf32>
    %93 = arith.mulf %90, %92 : vector<8x512xf32>
    %c1_i32_25 = arith.constant 1 : i32
    %94 = tpu.dynamic_rotate %77 by %c1_i32_25 dim 1 : vector<8x512xf32>, i32 -> vector<8x512xf32>
    %95 = vector.extract_strided_slice %1 {offsets = [3, 0], sizes = [1, 512], strides = [1, 1]} : vector<9x512xf32> to vector<1x512xf32>
    %96 = vector.broadcast %95 : vector<1x512xf32> to vector<8x512xf32>
    %97 = arith.mulf %94, %96 : vector<8x512xf32>
    %98 = vector.extract_strided_slice %1 {offsets = [4, 0], sizes = [1, 512], strides = [1, 1]} : vector<9x512xf32> to vector<1x512xf32>
    %99 = vector.broadcast %98 : vector<1x512xf32> to vector<8x512xf32>
    %100 = arith.mulf %77, %99 : vector<8x512xf32>
    %c511_i32_26 = arith.constant 511 : i32
    %101 = tpu.dynamic_rotate %77 by %c511_i32_26 dim 1 : vector<8x512xf32>, i32 -> vector<8x512xf32>
    %102 = vector.extract_strided_slice %1 {offsets = [5, 0], sizes = [1, 512], strides = [1, 1]} : vector<9x512xf32> to vector<1x512xf32>
    %103 = vector.broadcast %102 : vector<1x512xf32> to vector<8x512xf32>
    %104 = arith.mulf %101, %103 : vector<8x512xf32>
    %c497_i32_27 = arith.constant 497 : i32
    %105 = tpu.dynamic_rotate %77 by %c497_i32_27 dim 1 : vector<8x512xf32>, i32 -> vector<8x512xf32>
    %106 = vector.extract_strided_slice %1 {offsets = [6, 0], sizes = [1, 512], strides = [1, 1]} : vector<9x512xf32> to vector<1x512xf32>
    %107 = vector.broadcast %106 : vector<1x512xf32> to vector<8x512xf32>
    %108 = arith.mulf %105, %107 : vector<8x512xf32>
    %c496_i32_28 = arith.constant 496 : i32
    %109 = tpu.dynamic_rotate %77 by %c496_i32_28 dim 1 : vector<8x512xf32>, i32 -> vector<8x512xf32>
    %110 = vector.extract_strided_slice %1 {offsets = [7, 0], sizes = [1, 512], strides = [1, 1]} : vector<9x512xf32> to vector<1x512xf32>
    %111 = vector.broadcast %110 : vector<1x512xf32> to vector<8x512xf32>
    %112 = arith.mulf %109, %111 : vector<8x512xf32>
    %c495_i32_29 = arith.constant 495 : i32
    %113 = tpu.dynamic_rotate %77 by %c495_i32_29 dim 1 : vector<8x512xf32>, i32 -> vector<8x512xf32>
    %114 = vector.extract_strided_slice %1 {offsets = [8, 0], sizes = [1, 512], strides = [1, 1]} : vector<9x512xf32> to vector<1x512xf32>
    %115 = vector.broadcast %114 : vector<1x512xf32> to vector<8x512xf32>
    %116 = arith.mulf %113, %115 : vector<8x512xf32>
    %117 = tpu.concatenate %85, %89, %93, %97, %100, %104, %108, %112, %116 in 0 : vector<8x512xf32>, vector<8x512xf32>, vector<8x512xf32>, vector<8x512xf32>, vector<8x512xf32>, vector<8x512xf32>, vector<8x512xf32>, vector<8x512xf32>, vector<8x512xf32> -> vector<72x512xf32>
    %118 = arith.truncf %117 : vector<72x512xf32> to vector<72x512xbf16>
    %cst_30 = arith.constant dense<0.000000e+00> : vector<16x512xf32>
    %119 = tpu.matmul %78, %118, %cst_30 {dimension_numbers = #tpu.dot_dimension_numbers<[1], [0], [0], [1], [0, 0, 1, 1], [], []>} : vector<16x72xbf16>, vector<72x512xbf16>, vector<16x512xf32> -> vector<16x512xf32>
    %120 = vector.broadcast %79 : vector<16x1xf32> to vector<16x512xf32>
    %121 = arith.addf %119, %120 : vector<16x512xf32>
    %cst_31 = arith.constant dense<0.000000e+00> : vector<16x8xf32>
    %122 = tpu.matmul %121, %0, %cst_31 {dimension_numbers = #tpu.dot_dimension_numbers<[1], [1], [0], [0], [0, 0, 1, 0], [], []>} : vector<16x512xf32>, vector<8x512xf32>, vector<16x8xf32> -> vector<16x8xf32>
    %cst_32 = arith.constant dense<0.000000e+00> : vector<8xf32>
    %123 = vector.multi_reduction <add>, %122, %cst_32 [0] : vector<16x8xf32> to vector<8xf32>
    %124 = vector.shape_cast %123 : vector<8xf32> to vector<1x8xf32>
    %cst_33 = arith.constant 1.600000e+01 : f32
    %125 = vector.broadcast %cst_33 : f32 to vector<1x8xf32>
    %126 = arith.divf %124, %125 : vector<1x8xf32>
    %cst_34 = arith.constant dense<0.000000e+00> : vector<1x512xf32>
    %127 = tpu.matmul %126, %0, %cst_34 {dimension_numbers = #tpu.dot_dimension_numbers<[1], [0], [0], [1], [0, 0, 1, 1], [], []>} : vector<1x8xf32>, vector<8x512xf32>, vector<1x512xf32> -> vector<1x512xf32>
    %cst_35 = arith.constant 2.560000e+02 : f32
    %128 = vector.broadcast %cst_35 : f32 to vector<1x512xf32>
    %129 = arith.mulf %127, %128 : vector<1x512xf32>
    %130 = vector.broadcast %129 : vector<1x512xf32> to vector<16x512xf32>
    %131 = arith.subf %121, %130 : vector<16x512xf32>
    %132 = arith.mulf %131, %131 : vector<16x512xf32>
    %cst_36 = arith.constant dense<0.000000e+00> : vector<16x8xf32>
    %133 = tpu.matmul %132, %0, %cst_36 {dimension_numbers = #tpu.dot_dimension_numbers<[1], [1], [0], [0], [0, 0, 1, 0], [], []>} : vector<16x512xf32>, vector<8x512xf32>, vector<16x8xf32> -> vector<16x8xf32>
    %cst_37 = arith.constant dense<0.000000e+00> : vector<8xf32>
    %134 = vector.multi_reduction <add>, %133, %cst_37 [0] : vector<16x8xf32> to vector<8xf32>
    %135 = vector.shape_cast %134 : vector<8xf32> to vector<1x8xf32>
    %cst_38 = arith.constant 1.600000e+01 : f32
    %136 = vector.broadcast %cst_38 : f32 to vector<1x8xf32>
    %137 = arith.divf %135, %136 : vector<1x8xf32>
    %cst_39 = arith.constant dense<0.000000e+00> : vector<1x512xf32>
    %138 = tpu.matmul %137, %0, %cst_39 {dimension_numbers = #tpu.dot_dimension_numbers<[1], [0], [0], [1], [0, 0, 1, 1], [], []>} : vector<1x8xf32>, vector<8x512xf32>, vector<1x512xf32> -> vector<1x512xf32>
    %cst_40 = arith.constant 2.560000e+02 : f32
    %139 = vector.broadcast %cst_40 : f32 to vector<1x512xf32>
    %140 = arith.mulf %138, %139 : vector<1x512xf32>
    %cst_41 = arith.constant 9.99999974E-6 : f32
    %141 = vector.broadcast %cst_41 : f32 to vector<1x512xf32>
    %142 = arith.addf %140, %141 : vector<1x512xf32>
    %143 = math.rsqrt %142 : vector<1x512xf32>
    %144 = vector.broadcast %143 : vector<1x512xf32> to vector<16x512xf32>
    %145 = arith.mulf %131, %144 : vector<16x512xf32>
    %146 = vector.broadcast %80 : vector<16x1xf32> to vector<16x512xf32>
    %147 = arith.mulf %145, %146 : vector<16x512xf32>
    %148 = vector.broadcast %81 : vector<16x1xf32> to vector<16x512xf32>
    %149 = arith.addf %147, %148 : vector<16x512xf32>
    %cst_42 = arith.constant 0.000000e+00 : f32
    %150 = vector.broadcast %cst_42 : f32 to vector<16x512xf32>
    %151 = arith.maximumf %149, %150 : vector<16x512xf32>
    %cst_43 = arith.constant dense<0.000000e+00> : vector<8x16xf32>
    %152 = tpu.matmul %0, %151, %cst_43 {dimension_numbers = #tpu.dot_dimension_numbers<[1], [1], [0], [0], [0, 0, 1, 0], [], []>} : vector<8x512xf32>, vector<16x512xf32>, vector<8x16xf32> -> vector<8x16xf32>
    %c0_44 = arith.constant 0 : index
    %c0_45 = arith.constant 0 : index
    %153 = vector.load %arg4[%c0_44, %c0_45] : memref<17x128xf32, #tpu.memory_space<vmem>>, vector<16x128xf32>
    %c16 = arith.constant 16 : index
    %c0_46 = arith.constant 0 : index
    %154 = vector.load %arg4[%c16, %c0_46] : memref<17x128xf32, #tpu.memory_space<vmem>>, vector<1x128xf32>
    %cst_47 = arith.constant dense<0.000000e+00> : vector<8x128xf32>
    %155 = tpu.matmul %152, %153, %cst_47 {dimension_numbers = #tpu.dot_dimension_numbers<[1], [0], [0], [1], [0, 0, 1, 1], [], []>} : vector<8x16xf32>, vector<16x128xf32>, vector<8x128xf32> -> vector<8x128xf32>
    %156 = vector.broadcast %154 : vector<1x128xf32> to vector<8x128xf32>
    %157 = arith.addf %155, %156 : vector<8x128xf32>
    %c0_48 = arith.constant 0 : index
    %c0_49 = arith.constant 0 : index
    %158 = vector.load %arg6[%c0_48, %c0_49] : memref<8x128xf32, #tpu.memory_space<vmem>>, vector<8x128xf32>
    tpu.vector_store %arg6[%c0_48, %c0_49], %157 {strides = array<i32>} : memref<8x128xf32, #tpu.memory_space<vmem>>, vector<8x128xf32>,
    return
  }
}

</mosaic_0001>

<llo_original>
// kernel: single_submodel_forward.1
$region0: #{single_submodel_forward.1}
  #allocation0 [shape = 'u32[]', space=smem, size = 0x4, offset = 0x4, fixed_abs, tag = 'smem constant byte address 0x4 - core index']
  #allocation1 [shape = 'u32[144,128]{1,0:T(1,128)}', space=vmem, size = 0x12000, scoped, tag = 'internal scratch']
  %s0 = inlined_call_operand.vmem [shape: f32[4,512], index: 0, kind: input, shape index: {}]
  %s1 = inlined_call_operand.vmem [shape: f32[17,512], index: 1, kind: input, shape index: {}]
  %s2 = inlined_call_operand.vmem [shape: bf16[8,36], index: 2, kind: input, shape index: {}]
  %s3 = inlined_call_operand.vmem [shape: bf16[16,72], index: 3, kind: input, shape index: {}]
  %s4 = inlined_call_operand.vmem [shape: f32[17,128], index: 4, kind: input, shape index: {}]
  %s5 = inlined_call_operand.vmem [shape: f32[16,8], index: 5, kind: input, shape index: {}]
  %s6 = inlined_call_operand.vmem [shape: f32[8,128], index: 6, kind: output, shape index: {}]
  %s7 = sld [smem:[#allocation0]]
  $region34: #{single_submodel_forward.1} parent=0
    _
  %s9 = ssub.s32 1, %s7
  %s10 = scalar_select 0, %s9, %s7
  // Predicated region
  $region2: #{single_submodel_forward.1} parent=0 // pred_check
    _
  $region3: #{single_submodel_forward.1} parent=0 // pred_check_branch
    %12 = sbr.rel (0) target = $region5
  $region4: #{single_submodel_forward.1} parent=0 // pred_region
    _
  $region5: #{single_submodel_forward.1} parent=0 // pred_fallthru
    _
  // Predicated region
  $region6: #{single_submodel_forward.1} parent=0 // pred_check
    _
  $region7: #{single_submodel_forward.1} parent=0 // pred_check_branch
    %14 = sbr.rel (0) target = $region9
  $region8: #{single_submodel_forward.1} parent=0 // pred_region
    _
  $region9: #{single_submodel_forward.1} parent=0 // pred_fallthru
    _
  // Predicated region
  $region10: #{single_submodel_forward.1} parent=0 // pred_check
    _
  $region11: #{single_submodel_forward.1} parent=0 // pred_check_branch
    %16 = sbr.rel (0) target = $region13
  $region12: #{single_submodel_forward.1} parent=0 // pred_region
    _
  $region13: #{single_submodel_forward.1} parent=0 // pred_fallthru
    _
  // Predicated region
  $region14: #{single_submodel_forward.1} parent=0 // pred_check
    _
  $region15: #{single_submodel_forward.1} parent=0 // pred_check_branch
    %18 = sbr.rel (0) target = $region17
  $region16: #{single_submodel_forward.1} parent=0 // pred_region
    _
  $region17: #{single_submodel_forward.1} parent=0 // pred_fallthru
    _
  // Predicated region
  $region18: #{single_submodel_forward.1} parent=0 // pred_check
    _
  $region19: #{single_submodel_forward.1} parent=0 // pred_check_branch
    %20 = sbr.rel (0) target = $region21
  $region20: #{single_submodel_forward.1} parent=0 // pred_region
    _
  $region21: #{single_submodel_forward.1} parent=0 // pred_fallthru
    _
  // Predicated region
  $region22: #{single_submodel_forward.1} parent=0 // pred_check
    _
  $region23: #{single_submodel_forward.1} parent=0 // pred_check_branch
    %22 = sbr.rel (0) target = $region25
  $region24: #{single_submodel_forward.1} parent=0 // pred_region
    _
  $region25: #{single_submodel_forward.1} parent=0 // pred_fallthru
    _
  %v24 = vld [vmem:[%s1] sm:$0xff]
  %v25 = vld [vmem:[%s1 + $0x8] sm:$0xff]
  %v26 = vld [vmem:[%s1 + $0x10] sm:$0xff]
  %v27 = vld [vmem:[%s1 + $0x18] sm:$0xff]
  %v28 = vld [vmem:[%s1 + $0x20] sm:$0xff]
  %v29 = vld [vmem:[%s1 + $0x28] sm:$0xff]
  %v30 = vld [vmem:[%s1 + $0x30] sm:$0xff]
  %v31 = vld [vmem:[%s1 + $0x38] sm:$0xff]
  %v32 = vld [vmem:[%s1 + $0x40] sm:$0x1]
  %v33 = vld [vmem:[%s1 + $0x48] sm:$0x1]
  %v34 = vld [vmem:[%s1 + $0x50] sm:$0x1]
  %v35 = vld [vmem:[%s1 + $0x58] sm:$0x1]
  %v36 = vld [vmem:[%s5] sm:$0xff]
  %v37 = vld [vmem:[%s5 + $0x8] sm:$0xff]
  %v38 = vld [vmem:[%s0] sm:$0xff]
  %v39 = vld [vmem:[%s0 + $0x8] sm:$0xff]
  %v40 = vld [vmem:[%s2] sm:$0xf]
  %v43 = vcombine.high %v38, %v38
  %v44 = vcombine.high %v39, %v39
  %47 = vrot.lane.b32.xlu0 %v38, 17
  %v48 = vpop.permute.xlu0 %47
  %49 = vrot.lane.b32.xlu0 %v43, 17
  %v50 = vpop.permute.xlu0 %49
  %51 = vrot.lane.b32.xlu0 %v39, 17
  %v52 = vpop.permute.xlu0 %51
  %53 = vrot.lane.b32.xlu0 %v44, 17
  %v54 = vpop.permute.xlu0 %53
  %v55 = vlaneseq
  %v56 = vand.u32 %v55, 127
  %vm57 = vcmp.lt.s32.totalorder %v56, 17
  %v58 = vsel %vm57, %v52, %v54
  %v59 = vsel %vm57, %v50, %v52
  %v60 = vsel %vm57, %v48, %v50
  %v61 = vsel %vm57, %v54, %v48
  %v62 = vlaneseq
  %v63 = vshrl.u32 %v62, 7
  %v64 = vsub.s32 0, %v63
  %v65 = vrot.slane %v28, %v64
  %v66 = vlaneseq
  %v67 = vshrl.u32 %v66, 7
  %v68 = vsub.s32 0, %v67
  %v69 = vrot.slane %v29, %v68
  %v70 = vlaneseq
  %v71 = vshrl.u32 %v70, 7
  %v72 = vsub.s32 0, %v71
  %v73 = vrot.slane %v30, %v72
  %v74 = vlaneseq
  %v75 = vshrl.u32 %v74, 7
  %v76 = vsub.s32 0, %v75
  %v77 = vrot.slane %v31, %v76
  %v78 = vmul.f32 %v61, %v65
  %v79 = vmul.f32 %v60, %v69
  %v80 = vmul.f32 %v59, %v73
  %v81 = vmul.f32 %v58, %v77
  %82 = vrot.lane.b32.xlu0 %v38, 16
  %v83 = vpop.permute.xlu0 %82
  %84 = vrot.lane.b32.xlu0 %v43, 16
  %v85 = vpop.permute.xlu0 %84
  %86 = vrot.lane.b32.xlu0 %v39, 16
  %v87 = vpop.permute.xlu0 %86
  %88 = vrot.lane.b32.xlu0 %v44, 16
  %v89 = vpop.permute.xlu0 %88
  %vm90 = vcmp.lt.s32.totalorder %v56, 16
  %v91 = vsel %vm90, %v87, %v89
  %v92 = vsel %vm90, %v85, %v87
  %v93 = vsel %vm90, %v83, %v85
  %v94 = vsel %vm90, %v89, %v83
  %v95 = vlaneseq
  %v96 = vshrl.u32 %v95, 7
  %v97 = vsub.s32 1, %v96
  %v98 = vrot.slane %v28, %v97
  %v99 = vlaneseq
  %v100 = vshrl.u32 %v99, 7
  %v101 = vsub.s32 1, %v100
  %v102 = vrot.slane %v29, %v101
  %v103 = vlaneseq
  %v104 = vshrl.u32 %v103, 7
  %v105 = vsub.s32 1, %v104
  %v106 = vrot.slane %v30, %v105
  %v107 = vlaneseq
  %v108 = vshrl.u32 %v107, 7
  %v109 = vsub.s32 1, %v108
  %v110 = vrot.slane %v31, %v109
  %v111 = vmul.f32 %v94, %v98
  %v112 = vmul.f32 %v93, %v102
  %v113 = vmul.f32 %v92, %v106
  %v114 = vmul.f32 %v91, %v110
  %115 = vrot.lane.b32.xlu0 %v38, 15
  %v116 = vpop.permute.xlu0 %115
  %117 = vrot.lane.b32.xlu0 %v43, 15
  %v118 = vpop.permute.xlu0 %117
  %119 = vrot.lane.b32.xlu0 %v39, 15
  %v120 = vpop.permute.xlu0 %119
  %121 = vrot.lane.b32.xlu0 %v44, 15
  %v122 = vpop.permute.xlu0 %121
  %vm123 = vcmp.lt.s32.totalorder %v56, 15
  %v124 = vsel %vm123, %v120, %v122
  %v125 = vsel %vm123, %v118, %v120
  %v126 = vsel %vm123, %v116, %v118
  %v127 = vsel %vm123, %v122, %v116
  %v128 = vlaneseq
  %v129 = vshrl.u32 %v128, 7
  %v130 = vsub.s32 2, %v129
  %v131 = vrot.slane %v28, %v130
  %v132 = vlaneseq
  %v133 = vshrl.u32 %v132, 7
  %v134 = vsub.s32 2, %v133
  %v135 = vrot.slane %v29, %v134
  %v136 = vlaneseq
  %v137 = vshrl.u32 %v136, 7
  %v138 = vsub.s32 2, %v137
  %v139 = vrot.slane %v30, %v138
  %v140 = vlaneseq
  %v141 = vshrl.u32 %v140, 7
  %v142 = vsub.s32 2, %v141
  %v143 = vrot.slane %v31, %v142
  %v144 = vmul.f32 %v127, %v131
  %v145 = vmul.f32 %v126, %v135
  %v146 = vmul.f32 %v125, %v139
  %v147 = vmul.f32 %v124, %v143
  %148 = vrot.lane.b32.xlu0 %v38, 1
  %v149 = vpop.permute.xlu0 %148
  %150 = vrot.lane.b32.xlu0 %v43, 1
  %v151 = vpop.permute.xlu0 %150
  %152 = vrot.lane.b32.xlu0 %v39, 1
  %v153 = vpop.permute.xlu0 %152
  %154 = vrot.lane.b32.xlu0 %v44, 1
  %v155 = vpop.permute.xlu0 %154
  %vm156 = vcmp.lt.s32.totalorder %v56, 1
  %v157 = vsel %vm156, %v153, %v155
  %v158 = vsel %vm156, %v151, %v153
  %v159 = vsel %vm156, %v149, %v151
  %v160 = vsel %vm156, %v155, %v149
  %v161 = vlaneseq
  %v162 = vshrl.u32 %v161, 7
  %v163 = vsub.s32 3, %v162
  %v164 = vrot.slane %v28, %v163
  %v165 = vlaneseq
  %v166 = vshrl.u32 %v165, 7
  %v167 = vsub.s32 3, %v166
  %v168 = vrot.slane %v29, %v167
  %v169 = vlaneseq
  %v170 = vshrl.u32 %v169, 7
  %v171 = vsub.s32 3, %v170
  %v172 = vrot.slane %v30, %v171
  %v173 = vlaneseq
  %v174 = vshrl.u32 %v173, 7
  %v175 = vsub.s32 3, %v174
  %v176 = vrot.slane %v31, %v175
  %v177 = vmul.f32 %v160, %v164
  %v178 = vmul.f32 %v159, %v168
  %v179 = vmul.f32 %v158, %v172
  %v180 = vmul.f32 %v157, %v176
  %v181 = vlaneseq
  %v182 = vshrl.u32 %v181, 7
  %v183 = vsub.s32 4, %v182
  %v184 = vrot.slane %v28, %v183
  %v185 = vlaneseq
  %v186 = vshrl.u32 %v185, 7
  %v187 = vsub.s32 4, %v186
  %v188 = vrot.slane %v29, %v187
  %v189 = vlaneseq
  %v190 = vshrl.u32 %v189, 7
  %v191 = vsub.s32 4, %v190
  %v192 = vrot.slane %v30, %v191
  %v193 = vlaneseq
  %v194 = vshrl.u32 %v193, 7
  %v195 = vsub.s32 4, %v194
  %v196 = vrot.slane %v31, %v195
  %v201 = vcombine.low %v184, %v188
  %v202 = vcombine.low %v192, %v196
  %v205 = vmul.f32 %v38, %v201
  %v206 = vmul.f32 %v39, %v202
  %207 = vrot.lane.b32.xlu0 %v38, 127
  %v208 = vpop.permute.xlu0 %207
  %209 = vrot.lane.b32.xlu0 %v43, 127
  %v210 = vpop.permute.xlu0 %209
  %211 = vrot.lane.b32.xlu0 %v39, 127
  %v212 = vpop.permute.xlu0 %211
  %213 = vrot.lane.b32.xlu0 %v44, 127
  %v214 = vpop.permute.xlu0 %213
  %vm215 = vcmp.lt.s32.totalorder %v56, 127
  %v216 = vsel %vm215, %v212, %v214
  %v217 = vsel %vm215, %v210, %v212
  %v218 = vsel %vm215, %v208, %v210
  %v219 = vsel %vm215, %v214, %v208
  %v220 = vlaneseq
  %v221 = vshrl.u32 %v220, 7
  %v222 = vsub.s32 5, %v221
  %v223 = vrot.slane %v28, %v222
  %v224 = vlaneseq
  %v225 = vshrl.u32 %v224, 7
  %v226 = vsub.s32 5, %v225
  %v227 = vrot.slane %v29, %v226
  %v228 = vlaneseq
  %v229 = vshrl.u32 %v228, 7
  %v230 = vsub.s32 5, %v229
  %v231 = vrot.slane %v30, %v230
  %v232 = vlaneseq
  %v233 = vshrl.u32 %v232, 7
  %v234 = vsub.s32 5, %v233
  %v235 = vrot.slane %v31, %v234
  %v236 = vmul.f32 %v218, %v223
  %v237 = vmul.f32 %v217, %v227
  %v238 = vmul.f32 %v216, %v231
  %v239 = vmul.f32 %v219, %v235
  %240 = vrot.lane.b32.xlu0 %v38, 113
  %v241 = vpop.permute.xlu0 %240
  %242 = vrot.lane.b32.xlu0 %v43, 113
  %v243 = vpop.permute.xlu0 %242
  %244 = vrot.lane.b32.xlu0 %v39, 113
  %v245 = vpop.permute.xlu0 %244
  %246 = vrot.lane.b32.xlu0 %v44, 113
  %v247 = vpop.permute.xlu0 %246
  %vm248 = vcmp.lt.s32.totalorder %v56, 113
  %v249 = vsel %vm248, %v245, %v247
  %v250 = vsel %vm248, %v243, %v245
  %v251 = vsel %vm248, %v241, %v243
  %v252 = vsel %vm248, %v247, %v241
  %v253 = vlaneseq
  %v254 = vshrl.u32 %v253, 7
  %v255 = vsub.s32 6, %v254
  %v256 = vrot.slane %v28, %v255
  %v257 = vlaneseq
  %v258 = vshrl.u32 %v257, 7
  %v259 = vsub.s32 6, %v258
  %v260 = vrot.slane %v29, %v259
  %v261 = vlaneseq
  %v262 = vshrl.u32 %v261, 7
  %v263 = vsub.s32 6, %v262
  %v264 = vrot.slane %v30, %v263
  %v265 = vlaneseq
  %v266 = vshrl.u32 %v265, 7
  %v267 = vsub.s32 6, %v266
  %v268 = vrot.slane %v31, %v267
  %v269 = vmul.f32 %v251, %v256
  %v270 = vmul.f32 %v250, %v260
  %v271 = vmul.f32 %v249, %v264
  %v272 = vmul.f32 %v252, %v268
  %273 = vrot.lane.b32.xlu0 %v38, 112
  %v274 = vpop.permute.xlu0 %273
  %275 = vrot.lane.b32.xlu0 %v43, 112
  %v276 = vpop.permute.xlu0 %275
  %277 = vrot.lane.b32.xlu0 %v39, 112
  %v278 = vpop.permute.xlu0 %277
  %279 = vrot.lane.b32.xlu0 %v44, 112
  %v280 = vpop.permute.xlu0 %279
  %vm281 = vcmp.lt.s32.totalorder %v56, 112
  %v282 = vsel %vm281, %v278, %v280
  %v283 = vsel %vm281, %v276, %v278
  %v284 = vsel %vm281, %v274, %v276
  %v285 = vsel %vm281, %v280, %v274
  %v286 = vlaneseq
  %v287 = vshrl.u32 %v286, 7
  %v288 = vsub.s32 7, %v287
  %v289 = vrot.slane %v28, %v288
  %v290 = vlaneseq
  %v291 = vshrl.u32 %v290, 7
  %v292 = vsub.s32 7, %v291
  %v293 = vrot.slane %v29, %v292
  %v294 = vlaneseq
  %v295 = vshrl.u32 %v294, 7
  %v296 = vsub.s32 7, %v295
  %v297 = vrot.slane %v30, %v296
  %v298 = vlaneseq
  %v299 = vshrl.u32 %v298, 7
  %v300 = vsub.s32 7, %v299
  %v301 = vrot.slane %v31, %v300
  %v302 = vmul.f32 %v284, %v289
  %v303 = vmul.f32 %v283, %v293
  %v304 = vmul.f32 %v282, %v297
  %v305 = vmul.f32 %v285, %v301
  %306 = vrot.lane.b32.xlu0 %v38, 111
  %v307 = vpop.permute.xlu0 %306
  %308 = vrot.lane.b32.xlu0 %v43, 111
  %v309 = vpop.permute.xlu0 %308
  %310 = vrot.lane.b32.xlu0 %v39, 111
  %v311 = vpop.permute.xlu0 %310
  %312 = vrot.lane.b32.xlu0 %v44, 111
  %v313 = vpop.permute.xlu0 %312
  %vm314 = vcmp.lt.s32.totalorder %v56, 111
  %v315 = vsel %vm314, %v311, %v313
  %v316 = vsel %vm314, %v309, %v311
  %v317 = vsel %vm314, %v307, %v309
  %v318 = vsel %vm314, %v313, %v307
  %v319 = vlaneseq
  %v320 = vshrl.u32 %v319, 7
  %v321 = vsub.s32 0, %v320
  %v322 = vrot.slane %v32, %v321
  %v323 = vlaneseq
  %v324 = vshrl.u32 %v323, 7
  %v325 = vsub.s32 0, %v324
  %v326 = vrot.slane %v33, %v325
  %v327 = vlaneseq
  %v328 = vshrl.u32 %v327, 7
  %v329 = vsub.s32 0, %v328
  %v330 = vrot.slane %v34, %v329
  %v331 = vlaneseq
  %v332 = vshrl.u32 %v331, 7
  %v333 = vsub.s32 0, %v332
  %v334 = vrot.slane %v35, %v333
  %v335 = vmul.f32 %v317, %v322
  %v336 = vmul.f32 %v316, %v326
  %v337 = vmul.f32 %v315, %v330
  %v338 = vmul.f32 %v318, %v334
  %v343 = vrot.slane %v111, 4
  %v344 = vrot.slane %v112, 4
  %v345 = vrot.slane %v113, 4
  %v346 = vrot.slane %v114, 4
  %v355 = vrot.slane %v177, 4
  %v356 = vrot.slane %v178, 4
  %v357 = vrot.slane %v179, 4
  %v358 = vrot.slane %v180, 4
  %v365 = vcombine.high %v205, %v205
  %v366 = vcombine.high %v206, %v206
  %v373 = vrot.slane %v236, 4
  %v374 = vrot.slane %v237, 4
  %v375 = vrot.slane %v238, 4
  %v376 = vrot.slane %v239, 4
  %v385 = vrot.slane %v302, 4
  %v386 = vrot.slane %v303, 4
  %v387 = vrot.slane %v304, 4
  %v388 = vrot.slane %v305, 4
  %vm393 = vcmask 1043456
  %v394 = vsel %vm393, %v78, %v343
  %v395 = vsel %vm393, %v79, %v344
  %v396 = vsel %vm393, %v80, %v345
  %v397 = vsel %vm393, %v81, %v346
  %v398 = vsel %vm393, %v144, %v355
  %v399 = vsel %vm393, %v145, %v356
  %v400 = vsel %vm393, %v146, %v357
  %v401 = vsel %vm393, %v147, %v358
  %v402 = vsel %vm393, %v205, %v373
  %v403 = vsel %vm393, %v365, %v374
  %v404 = vsel %vm393, %v206, %v375
  %v405 = vsel %vm393, %v366, %v376
  %v406 = vsel %vm393, %v269, %v385
  %v407 = vsel %vm393, %v270, %v386
  %v408 = vsel %vm393, %v271, %v387
  %v409 = vsel %vm393, %v272, %v388
  %v410 = vpack.c.bf16 %v398, %v394
  %v411 = vpack.c.bf16 %v399, %v395
  %v412 = vpack.c.bf16 %v400, %v396
  %v413 = vpack.c.bf16 %v401, %v397
  %v414 = vpack.c.bf16 %v406, %v402
  %v415 = vpack.c.bf16 %v407, %v403
  %v416 = vpack.c.bf16 %v408, %v404
  %v417 = vpack.c.bf16 %v409, %v405
  %v418 = vpack.c.bf16 %v335, %v335
  %v419 = vpack.c.bf16 %v336, %v336
  %v420 = vpack.c.bf16 %v337, %v337
  %v421 = vpack.c.bf16 %v338, %v338
  %423 = vset.pattern.permute.xlu0 0
  %424 = vperm.xlu0 %423, %v36
  %v425 = vpop.permute.xlu0 %424
  %vm427 = vcmask 293888
  %v429 = vsel %vm427, %v40, 0
  %vm431 = vcmask 1041408
  %v433 = vsel %vm431, %v418, 0
  %v436 = vsel %vm431, %v419, 0
  %v439 = vsel %vm431, %v420, 0
  %v442 = vsel %vm431, %v421, 0
  %444 = vmatprep.subr.bf16.mxu0 0
  %445 = vmatpush1.bf16.msra.mxu0 0
  %446 = vmatprep.subr.bf16.mxu0 0
  %447 = vmatpush1.bf16.msra.mxu0 0
  %448 = vmatprep.subr.bf16.mxu0 0
  %449 = vmatpush1.bf16.msra.mxu0 0
  %450 = vmatprep.subr.bf16.mxu0 0
  %451 = vmatpush1.bf16.msra.mxu0 0
  %452 = vmatprep.subr.bf16.mxu0 0
  %453 = vmatpush1.bf16.msra.mxu0 0
  %454 = vmatprep.subr.bf16.mxu0 %v436
  %455 = vmatpush1.bf16.msra.mxu0 %v433
  %456 = vmatprep.subr.bf16.mxu0 %v415
  %457 = vmatpush1.bf16.msra.mxu0 %v414
  %458 = vmatprep.subr.bf16.mxu0 %v411
  %459 = vmatpush1.bf16.msra.mxu0 %v410
  %460 = vmatprep.subr.bf16.mxu0 0
  %461 = vmatpush2.bf16.msra.mxu0 0
  %462 = vmatprep.subr.bf16.mxu0 0
  %463 = vmatpush2.bf16.msra.mxu0 0
  %464 = vmatprep.subr.bf16.mxu0 0
  %465 = vmatpush2.bf16.msra.mxu0 0
  %466 = vmatprep.subr.bf16.mxu0 0
  %467 = vmatpush2.bf16.msra.mxu0 0
  %468 = vmatprep.subr.bf16.mxu0 0
  %469 = vmatpush2.bf16.msra.mxu0 0
  %470 = vmatprep.subr.bf16.mxu0 0
  %471 = vmatpush2.bf16.msra.mxu0 0
  %472 = vmatprep.subr.bf16.mxu0 0
  %473 = vmatpush2.bf16.msra.mxu0 0
  %474 = vmatprep.subr.bf16.mxu0 0
  %475 = vmatpush2.bf16.msra.mxu0 0
  %476 = vmatprep.mubr.bf16.mxu0 0
  %477 = vmatmul.mubr.bf16.gmra.mxu0 %v429
  %v478 = vpop.f32.mrf.mxu0
  %v479 = vadd.f32 %v425, %v478
  %v480 = vpop.f32.mrf.mxu0
  %v481 = vadd.f32 %v425, %v480
  %v482 = vpop.f32.mrf.mxu0
  %v483 = vpop.f32.mrf.mxu0
  %484 = vdwg.mxu0
  %485 = vmatprep.subr.bf16.mxu0 0
  %486 = vmatpush1.bf16.msra.mxu0 0
  %487 = vmatprep.subr.bf16.mxu0 0
  %488 = vmatpush1.bf16.msra.mxu0 0
  %489 = vmatprep.subr.bf16.mxu0 0
  %490 = vmatpush1.bf16.msra.mxu0 0
  %491 = vmatprep.subr.bf16.mxu0 0
  %492 = vmatpush1.bf16.msra.mxu0 0
  %493 = vmatprep.subr.bf16.mxu0 0
  %494 = vmatpush1.bf16.msra.mxu0 0
  %495 = vmatprep.subr.bf16.mxu0 %v442
  %496 = vmatpush1.bf16.msra.mxu0 %v439
  %497 = vmatprep.subr.bf16.mxu0 %v417
  %498 = vmatpush1.bf16.msra.mxu0 %v416
  %499 = vmatprep.subr.bf16.mxu0 %v413
  %500 = vmatpush1.bf16.msra.mxu0 %v412
  %501 = vmatprep.subr.bf16.mxu0 0
  %502 = vmatpush2.bf16.msra.mxu0 0
  %503 = vmatprep.subr.bf16.mxu0 0
  %504 = vmatpush2.bf16.msra.mxu0 0
  %505 = vmatprep.subr.bf16.mxu0 0
  %506 = vmatpush2.bf16.msra.mxu0 0
  %507 = vmatprep.subr.bf16.mxu0 0
  %508 = vmatpush2.bf16.msra.mxu0 0
  %509 = vmatprep.subr.bf16.mxu0 0
  %510 = vmatpush2.bf16.msra.mxu0 0
  %511 = vmatprep.subr.bf16.mxu0 0
  %512 = vmatpush2.bf16.msra.mxu0 0
  %513 = vmatprep.subr.bf16.mxu0 0
  %514 = vmatpush2.bf16.msra.mxu0 0
  %515 = vmatprep.subr.bf16.mxu0 0
  %516 = vmatpush2.bf16.msra.mxu0 0
  %517 = vmatprep.mubr.bf16.mxu0 0
  %518 = vmatmul.mubr.bf16.gmra.mxu0 %v429
  %v519 = vpop.f32.mrf.mxu0
  %v520 = vadd.f32 %v425, %v519
  %v521 = vpop.f32.mrf.mxu0
  %v522 = vadd.f32 %v425, %v521
  %v523 = vpop.f32.mrf.mxu0
  %v524 = vpop.f32.mrf.mxu0
  %525 = vdwg.mxu0
  %526 = vmatprep.subr.mxu0 0.0
  %527 = vmatpush1.xpose.msra.mxu0 0.0
  %528 = vmatprep.subr.mxu0 0.0
  %529 = vmatpush1.xpose.msra.mxu0 0.0
  %530 = vmatprep.subr.mxu0 0.0
  %531 = vmatpush1.xpose.msra.mxu0 0.0
  %532 = vmatprep.subr.mxu0 0.0
  %533 = vmatpush1.xpose.msra.mxu0 0.0
  %534 = vmatprep.subr.mxu0 0.0
  %535 = vmatpush1.xpose.msra.mxu0 0.0
  %536 = vmatprep.subr.mxu0 0.0
  %537 = vmatpush1.xpose.msra.mxu0 0.0
  %538 = vmatprep.subr.mxu0 0.0
  %539 = vmatpush1.xpose.msra.mxu0 0.0
  %540 = vmatprep.subr.mxu0 0.0
  %541 = vmatpush1.xpose.msra.mxu0 0.0
  %542 = vmatprep.subr.mxu0 0.0
  %543 = vmatpush1.xpose.msra.mxu0 0.0
  %544 = vmatprep.subr.mxu0 0.0
  %545 = vmatpush1.xpose.msra.mxu0 0.0
  %546 = vmatprep.subr.mxu0 0.0
  %547 = vmatpush1.xpose.msra.mxu0 0.0
  %548 = vmatprep.subr.mxu0 0.0
  %549 = vmatpush1.xpose.msra.mxu0 0.0
  %550 = vmatprep.subr.mxu0 0.0
  %551 = vmatpush1.xpose.msra.mxu0 0.0
  %552 = vmatprep.subr.mxu0 0.0
  %553 = vmatpush1.xpose.msra.mxu0 0.0
  %554 = vmatprep.subr.mxu0 0.0
  %555 = vmatpush1.xpose.msra.mxu0 0.0
  %556 = vmatprep.subr.mxu0 %v25
  %557 = vmatpush1.xpose.msra.mxu0 %v24
  %558 = vmatprep.subr.mxu0 0.0
  %559 = vmatpush2.xpose.msra.mxu0 0.0
  %560 = vmatprep.subr.mxu0 0.0
  %561 = vmatpush2.xpose.msra.mxu0 0.0
  %562 = vmatprep.subr.mxu0 0.0
  %563 = vmatpush2.xpose.msra.mxu0 0.0
  %564 = vmatprep.subr.mxu0 0.0
  %565 = vmatpush2.xpose.msra.mxu0 0.0
  %566 = vmatprep.subr.mxu0 0.0
  %567 = vmatpush2.xpose.msra.mxu0 0.0
  %568 = vmatprep.subr.mxu0 0.0
  %569 = vmatpush2.xpose.msra.mxu0 0.0
  %570 = vmatprep.subr.mxu0 0.0
  %571 = vmatpush2.xpose.msra.mxu0 0.0
  %572 = vmatprep.subr.mxu0 0.0
  %573 = vmatpush2.xpose.msra.mxu0 0.0
  %574 = vmatprep.subr.mxu0 0.0
  %575 = vmatpush2.xpose.msra.mxu0 0.0
  %576 = vmatprep.subr.mxu0 0.0
  %577 = vmatpush2.xpose.msra.mxu0 0.0
  %578 = vmatprep.subr.mxu0 0.0
  %579 = vmatpush2.xpose.msra.mxu0 0.0
  %580 = vmatprep.subr.mxu0 0.0
  %581 = vmatpush2.xpose.msra.mxu0 0.0
  %582 = vmatprep.subr.mxu0 0.0
  %583 = vmatpush2.xpose.msra.mxu0 0.0
  %584 = vmatprep.subr.mxu0 0.0
  %585 = vmatpush2.xpose.msra.mxu0 0.0
  %586 = vmatprep.subr.mxu0 0.0
  %587 = vmatpush2.xpose.msra.mxu0 0.0
  %588 = vmatprep.subr.mxu0 0.0
  %589 = vmatpush2.xpose.msra.mxu0 0.0
  %590 = vmatprep.mubr.f32.mxu0 %v481
  %591 = vmatmul.mubr.f32.gmra.mxu0 %v479
  %v592 = vpop.f32.mrf.mxu0
  %v593 = vadd.f32 0.0, %v592
  %v594 = vpop.f32.mrf.mxu0
  %595 = vdwg.mxu0
  %596 = vmatprep.subr.mxu0 0.0
  %597 = vmatpush1.xpose.msra.mxu0 0.0
  %598 = vmatprep.subr.mxu0 0.0
  %599 = vmatpush1.xpose.msra.mxu0 0.0
  %600 = vmatprep.subr.mxu0 0.0
  %601 = vmatpush1.xpose.msra.mxu0 0.0
  %602 = vmatprep.subr.mxu0 0.0
  %603 = vmatpush1.xpose.msra.mxu0 0.0
  %604 = vmatprep.subr.mxu0 0.0
  %605 = vmatpush1.xpose.msra.mxu0 0.0
  %606 = vmatprep.subr.mxu0 0.0
  %607 = vmatpush1.xpose.msra.mxu0 0.0
  %608 = vmatprep.subr.mxu0 0.0
  %609 = vmatpush1.xpose.msra.mxu0 0.0
  %610 = vmatprep.subr.mxu0 0.0
  %611 = vmatpush1.xpose.msra.mxu0 0.0
  %612 = vmatprep.subr.mxu0 0.0
  %613 = vmatpush1.xpose.msra.mxu0 0.0
  %614 = vmatprep.subr.mxu0 0.0
  %615 = vmatpush1.xpose.msra.mxu0 0.0
  %616 = vmatprep.subr.mxu0 0.0
  %617 = vmatpush1.xpose.msra.mxu0 0.0
  %618 = vmatprep.subr.mxu0 0.0
  %619 = vmatpush1.xpose.msra.mxu0 0.0
  %620 = vmatprep.subr.mxu0 0.0
  %621 = vmatpush1.xpose.msra.mxu0 0.0
  %622 = vmatprep.subr.mxu0 0.0
  %623 = vmatpush1.xpose.msra.mxu0 0.0
  %624 = vmatprep.subr.mxu0 0.0
  %625 = vmatpush1.xpose.msra.mxu0 0.0
  %626 = vmatprep.subr.mxu0 %v27
  %627 = vmatpush1.xpose.msra.mxu0 %v26
  %628 = vmatprep.subr.mxu0 0.0
  %629 = vmatpush2.xpose.msra.mxu0 0.0
  %630 = vmatprep.subr.mxu0 0.0
  %631 = vmatpush2.xpose.msra.mxu0 0.0
  %632 = vmatprep.subr.mxu0 0.0
  %633 = vmatpush2.xpose.msra.mxu0 0.0
  %634 = vmatprep.subr.mxu0 0.0
  %635 = vmatpush2.xpose.msra.mxu0 0.0
  %636 = vmatprep.subr.mxu0 0.0
  %637 = vmatpush2.xpose.msra.mxu0 0.0
  %638 = vmatprep.subr.mxu0 0.0
  %639 = vmatpush2.xpose.msra.mxu0 0.0
  %640 = vmatprep.subr.mxu0 0.0
  %641 = vmatpush2.xpose.msra.mxu0 0.0
  %642 = vmatprep.subr.mxu0 0.0
  %643 = vmatpush2.xpose.msra.mxu0 0.0
  %644 = vmatprep.subr.mxu0 0.0
  %645 = vmatpush2.xpose.msra.mxu0 0.0
  %646 = vmatprep.subr.mxu0 0.0
  %647 = vmatpush2.xpose.msra.mxu0 0.0
  %648 = vmatprep.subr.mxu0 0.0
  %649 = vmatpush2.xpose.msra.mxu0 0.0
  %650 = vmatprep.subr.mxu0 0.0
  %651 = vmatpush2.xpose.msra.mxu0 0.0
  %652 = vmatprep.subr.mxu0 0.0
  %653 = vmatpush2.xpose.msra.mxu0 0.0
  %654 = vmatprep.subr.mxu0 0.0
  %655 = vmatpush2.xpose.msra.mxu0 0.0
  %656 = vmatprep.subr.mxu0 0.0
  %657 = vmatpush2.xpose.msra.mxu0 0.0
  %658 = vmatprep.subr.mxu0 0.0
  %659 = vmatpush2.xpose.msra.mxu0 0.0
  %660 = vmatprep.mubr.f32.mxu0 %v522
  %661 = vmatmul.mubr.f32.gmra.mxu0 %v520
  %v662 = vpop.f32.mrf.mxu0
  %v663 = vadd.f32 %v593, %v662
  %v664 = vpop.f32.mrf.mxu0
  %665 = vdwg.mxu0
  %vm666 = vcmask 64512
  %v667 = vsel %vm666, %v663, 0.0
  %v668 = vrot.slane %v667, 4
  %v669 = vadd.f32 %v667, %v668
  %v670 = vrot.slane %v669, 2
  %v671 = vadd.f32 %v669, %v670
  %v672 = vrot.slane %v671, 1
  %v673 = vadd.f32 %v671, %v672
  %v674 = vrcp.pop 8.0
  %v675 = vmul.f32 %v673, %v674
  %v677 = vsel %vm666, %v675, 0
  %679 = vmatprep.subr.mxu0 0.0
  %680 = vmatpush1.msra.mxu0 0.0
  %681 = vmatprep.subr.mxu0 0.0
  %682 = vmatpush1.msra.mxu0 0.0
  %683 = vmatprep.subr.mxu0 0.0
  %684 = vmatpush1.msra.mxu0 0.0
  %685 = vmatprep.subr.mxu0 0.0
  %686 = vmatpush1.msra.mxu0 0.0
  %687 = vmatprep.subr.mxu0 0.0
  %688 = vmatpush1.msra.mxu0 0.0
  %689 = vmatprep.subr.mxu0 0.0
  %690 = vmatpush1.msra.mxu0 0.0
  %691 = vmatprep.subr.mxu0 0.0
  %692 = vmatpush1.msra.mxu0 0.0
  %693 = vmatprep.subr.mxu0 0.0
  %694 = vmatpush1.msra.mxu0 0.0
  %695 = vmatprep.subr.mxu0 0.0
  %696 = vmatpush1.msra.mxu0 0.0
  %697 = vmatprep.subr.mxu0 0.0
  %698 = vmatpush1.msra.mxu0 0.0
  %699 = vmatprep.subr.mxu0 0.0
  %700 = vmatpush1.msra.mxu0 0.0
  %701 = vmatprep.subr.mxu0 0.0
  %702 = vmatpush1.msra.mxu0 0.0
  %703 = vmatprep.subr.mxu0 0.0
  %704 = vmatpush1.msra.mxu0 0.0
  %705 = vmatprep.subr.mxu0 0.0
  %706 = vmatpush1.msra.mxu0 0.0
  %707 = vmatprep.subr.mxu0 0.0
  %708 = vmatpush1.msra.mxu0 0.0
  %709 = vmatprep.subr.mxu0 %v25
  %710 = vmatpush1.msra.mxu0 %v24
  %711 = vmatprep.subr.mxu0 0.0
  %712 = vmatpush2.msra.mxu0 0.0
  %713 = vmatprep.subr.mxu0 0.0
  %714 = vmatpush2.msra.mxu0 0.0
  %715 = vmatprep.subr.mxu0 0.0
  %716 = vmatpush2.msra.mxu0 0.0
  %717 = vmatprep.subr.mxu0 0.0
  %718 = vmatpush2.msra.mxu0 0.0
  %719 = vmatprep.subr.mxu0 0.0
  %720 = vmatpush2.msra.mxu0 0.0
  %721 = vmatprep.subr.mxu0 0.0
  %722 = vmatpush2.msra.mxu0 0.0
  %723 = vmatprep.subr.mxu0 0.0
  %724 = vmatpush2.msra.mxu0 0.0
  %725 = vmatprep.subr.mxu0 0.0
  %726 = vmatpush2.msra.mxu0 0.0
  %727 = vmatprep.subr.mxu0 0.0
  %728 = vmatpush2.msra.mxu0 0.0
  %729 = vmatprep.subr.mxu0 0.0
  %730 = vmatpush2.msra.mxu0 0.0
  %731 = vmatprep.subr.mxu0 0.0
  %732 = vmatpush2.msra.mxu0 0.0
  %733 = vmatprep.subr.mxu0 0.0
  %734 = vmatpush2.msra.mxu0 0.0
  %735 = vmatprep.subr.mxu0 0.0
  %736 = vmatpush2.msra.mxu0 0.0
  %737 = vmatprep.subr.mxu0 0.0
  %738 = vmatpush2.msra.mxu0 0.0
  %739 = vmatprep.subr.mxu0 0.0
  %740 = vmatpush2.msra.mxu0 0.0
  %741 = vmatprep.subr.mxu0 0.0
  %742 = vmatpush2.msra.mxu0 0.0
  %743 = vmatprep.mubr.f32.mxu0 0.0
  %744 = vmatmul.mubr.f32.gmra.mxu0 %v677
  %v745 = vpop.f32.mrf.mxu0
  %v746 = vadd.f32 0.0, %v745
  %v747 = vpop.f32.mrf.mxu0
  %v748 = vadd.f32 0.0, %v747
  %749 = vdwg.mxu0
  %750 = vmatprep.subr.mxu0 0.0
  %751 = vmatpush1.msra.mxu0 0.0
  %752 = vmatprep.subr.mxu0 0.0
  %753 = vmatpush1.msra.mxu0 0.0
  %754 = vmatprep.subr.mxu0 0.0
  %755 = vmatpush1.msra.mxu0 0.0
  %756 = vmatprep.subr.mxu0 0.0
  %757 = vmatpush1.msra.mxu0 0.0
  %758 = vmatprep.subr.mxu0 0.0
  %759 = vmatpush1.msra.mxu0 0.0
  %760 = vmatprep.subr.mxu0 0.0
  %761 = vmatpush1.msra.mxu0 0.0
  %762 = vmatprep.subr.mxu0 0.0
  %763 = vmatpush1.msra.mxu0 0.0
  %764 = vmatprep.subr.mxu0 0.0
  %765 = vmatpush1.msra.mxu0 0.0
  %766 = vmatprep.subr.mxu0 0.0
  %767 = vmatpush1.msra.mxu0 0.0
  %768 = vmatprep.subr.mxu0 0.0
  %769 = vmatpush1.msra.mxu0 0.0
  %770 = vmatprep.subr.mxu0 0.0
  %771 = vmatpush1.msra.mxu0 0.0
  %772 = vmatprep.subr.mxu0 0.0
  %773 = vmatpush1.msra.mxu0 0.0
  %774 = vmatprep.subr.mxu0 0.0
  %775 = vmatpush1.msra.mxu0 0.0
  %776 = vmatprep.subr.mxu0 0.0
  %777 = vmatpush1.msra.mxu0 0.0
  %778 = vmatprep.subr.mxu0 0.0
  %779 = vmatpush1.msra.mxu0 0.0
  %780 = vmatprep.subr.mxu0 %v27
  %781 = vmatpush1.msra.mxu0 %v26
  %782 = vmatprep.subr.mxu0 0.0
  %783 = vmatpush2.msra.mxu0 0.0
  %784 = vmatprep.subr.mxu0 0.0
  %785 = vmatpush2.msra.mxu0 0.0
  %786 = vmatprep.subr.mxu0 0.0
  %787 = vmatpush2.msra.mxu0 0.0
  %788 = vmatprep.subr.mxu0 0.0
  %789 = vmatpush2.msra.mxu0 0.0
  %790 = vmatprep.subr.mxu0 0.0
  %791 = vmatpush2.msra.mxu0 0.0
  %792 = vmatprep.subr.mxu0 0.0
  %793 = vmatpush2.msra.mxu0 0.0
  %794 = vmatprep.subr.mxu0 0.0
  %795 = vmatpush2.msra.mxu0 0.0
  %796 = vmatprep.subr.mxu0 0.0
  %797 = vmatpush2.msra.mxu0 0.0
  %798 = vmatprep.subr.mxu0 0.0
  %799 = vmatpush2.msra.mxu0 0.0
  %800 = vmatprep.subr.mxu0 0.0
  %801 = vmatpush2.msra.mxu0 0.0
  %802 = vmatprep.subr.mxu0 0.0
  %803 = vmatpush2.msra.mxu0 0.0
  %804 = vmatprep.subr.mxu0 0.0
  %805 = vmatpush2.msra.mxu0 0.0
  %806 = vmatprep.subr.mxu0 0.0
  %807 = vmatpush2.msra.mxu0 0.0
  %808 = vmatprep.subr.mxu0 0.0
  %809 = vmatpush2.msra.mxu0 0.0
  %810 = vmatprep.subr.mxu0 0.0
  %811 = vmatpush2.msra.mxu0 0.0
  %812 = vmatprep.subr.mxu0 0.0
  %813 = vmatpush2.msra.mxu0 0.0
  %814 = vmatprep.mubr.f32.mxu0 0.0
  %815 = vmatmul.mubr.f32.gmra.mxu0 %v677
  %v816 = vpop.f32.mrf.mxu0
  %v817 = vadd.f32 0.0, %v816
  %v818 = vpop.f32.mrf.mxu0
  %v819 = vadd.f32 0.0, %v818
  %820 = vdwg.mxu0
  %v821 = vmul.f32 %v746, 256.0
  %v822 = vmul.f32 %v748, 256.0
  %v823 = vmul.f32 %v817, 256.0
  %v824 = vmul.f32 %v819, 256.0
  %v825 = vlaneseq
  %v826 = vshrl.u32 %v825, 7
  %v827 = vsub.s32 0, %v826
  %v828 = vrot.slane %v821, %v827
  %v829 = vlaneseq
  %v830 = vshrl.u32 %v829, 7
  %v831 = vsub.s32 0, %v830
  %v832 = vrot.slane %v822, %v831
  %v833 = vlaneseq
  %v834 = vshrl.u32 %v833, 7
  %v835 = vsub.s32 0, %v834
  %v836 = vrot.slane %v823, %v835
  %v837 = vlaneseq
  %v838 = vshrl.u32 %v837, 7
  %v839 = vsub.s32 0, %v838
  %v840 = vrot.slane %v824, %v839
  %v841 = vsub.f32 %v479, %v828
  %v842 = vsub.f32 %v481, %v832
  %v843 = vsub.f32 %v520, %v836
  %v844 = vsub.f32 %v522, %v840
  %v845 = vmul.f32 %v841, %v841
  %v846 = vmul.f32 %v842, %v842
  %v847 = vmul.f32 %v843, %v843
  %v848 = vmul.f32 %v844, %v844
  %849 = vmatprep.subr.mxu0 0.0
  %850 = vmatpush1.xpose.msra.mxu0 0.0
  %851 = vmatprep.subr.mxu0 0.0
  %852 = vmatpush1.xpose.msra.mxu0 0.0
  %853 = vmatprep.subr.mxu0 0.0
  %854 = vmatpush1.xpose.msra.mxu0 0.0
  %855 = vmatprep.subr.mxu0 0.0
  %856 = vmatpush1.xpose.msra.mxu0 0.0
  %857 = vmatprep.subr.mxu0 0.0
  %858 = vmatpush1.xpose.msra.mxu0 0.0
  %859 = vmatprep.subr.mxu0 0.0
  %860 = vmatpush1.xpose.msra.mxu0 0.0
  %861 = vmatprep.subr.mxu0 0.0
  %862 = vmatpush1.xpose.msra.mxu0 0.0
  %863 = vmatprep.subr.mxu0 0.0
  %864 = vmatpush1.xpose.msra.mxu0 0.0
  %865 = vmatprep.subr.mxu0 0.0
  %866 = vmatpush1.xpose.msra.mxu0 0.0
  %867 = vmatprep.subr.mxu0 0.0
  %868 = vmatpush1.xpose.msra.mxu0 0.0
  %869 = vmatprep.subr.mxu0 0.0
  %870 = vmatpush1.xpose.msra.mxu0 0.0
  %871 = vmatprep.subr.mxu0 0.0
  %872 = vmatpush1.xpose.msra.mxu0 0.0
  %873 = vmatprep.subr.mxu0 0.0
  %874 = vmatpush1.xpose.msra.mxu0 0.0
  %875 = vmatprep.subr.mxu0 0.0
  %876 = vmatpush1.xpose.msra.mxu0 0.0
  %877 = vmatprep.subr.mxu0 0.0
  %878 = vmatpush1.xpose.msra.mxu0 0.0
  %879 = vmatprep.subr.mxu0 %v25
  %880 = vmatpush1.xpose.msra.mxu0 %v24
  %881 = vmatprep.subr.mxu0 0.0
  %882 = vmatpush2.xpose.msra.mxu0 0.0
  %883 = vmatprep.subr.mxu0 0.0
  %884 = vmatpush2.xpose.msra.mxu0 0.0
  %885 = vmatprep.subr.mxu0 0.0
  %886 = vmatpush2.xpose.msra.mxu0 0.0
  %887 = vmatprep.subr.mxu0 0.0
  %888 = vmatpush2.xpose.msra.mxu0 0.0
  %889 = vmatprep.subr.mxu0 0.0
  %890 = vmatpush2.xpose.msra.mxu0 0.0
  %891 = vmatprep.subr.mxu0 0.0
  %892 = vmatpush2.xpose.msra.mxu0 0.0
  %893 = vmatprep.subr.mxu0 0.0
  %894 = vmatpush2.xpose.msra.mxu0 0.0
  %895 = vmatprep.subr.mxu0 0.0
  %896 = vmatpush2.xpose.msra.mxu0 0.0
  %897 = vmatprep.subr.mxu0 0.0
  %898 = vmatpush2.xpose.msra.mxu0 0.0
  %899 = vmatprep.subr.mxu0 0.0
  %900 = vmatpush2.xpose.msra.mxu0 0.0
  %901 = vmatprep.subr.mxu0 0.0
  %902 = vmatpush2.xpose.msra.mxu0 0.0
  %903 = vmatprep.subr.mxu0 0.0
  %904 = vmatpush2.xpose.msra.mxu0 0.0
  %905 = vmatprep.subr.mxu0 0.0
  %906 = vmatpush2.xpose.msra.mxu0 0.0
  %907 = vmatprep.subr.mxu0 0.0
  %908 = vmatpush2.xpose.msra.mxu0 0.0
  %909 = vmatprep.subr.mxu0 0.0
  %910 = vmatpush2.xpose.msra.mxu0 0.0
  %911 = vmatprep.subr.mxu0 0.0
  %912 = vmatpush2.xpose.msra.mxu0 0.0
  %913 = vmatprep.mubr.f32.mxu0 %v846
  %914 = vmatmul.mubr.f32.gmra.mxu0 %v845
  %v915 = vpop.f32.mrf.mxu0
  %v916 = vadd.f32 0.0, %v915
  %v917 = vpop.f32.mrf.mxu0
  %918 = vdwg.mxu0
  %919 = vmatprep.subr.mxu0 0.0
  %920 = vmatpush1.xpose.msra.mxu0 0.0
  %921 = vmatprep.subr.mxu0 0.0
  %922 = vmatpush1.xpose.msra.mxu0 0.0
  %923 = vmatprep.subr.mxu0 0.0
  %924 = vmatpush1.xpose.msra.mxu0 0.0
  %925 = vmatprep.subr.mxu0 0.0
  %926 = vmatpush1.xpose.msra.mxu0 0.0
  %927 = vmatprep.subr.mxu0 0.0
  %928 = vmatpush1.xpose.msra.mxu0 0.0
  %929 = vmatprep.subr.mxu0 0.0
  %930 = vmatpush1.xpose.msra.mxu0 0.0
  %931 = vmatprep.subr.mxu0 0.0
  %932 = vmatpush1.xpose.msra.mxu0 0.0
  %933 = vmatprep.subr.mxu0 0.0
  %934 = vmatpush1.xpose.msra.mxu0 0.0
  %935 = vmatprep.subr.mxu0 0.0
  %936 = vmatpush1.xpose.msra.mxu0 0.0
  %937 = vmatprep.subr.mxu0 0.0
  %938 = vmatpush1.xpose.msra.mxu0 0.0
  %939 = vmatprep.subr.mxu0 0.0
  %940 = vmatpush1.xpose.msra.mxu0 0.0
  %941 = vmatprep.subr.mxu0 0.0
  %942 = vmatpush1.xpose.msra.mxu0 0.0
  %943 = vmatprep.subr.mxu0 0.0
  %944 = vmatpush1.xpose.msra.mxu0 0.0
  %945 = vmatprep.subr.mxu0 0.0
  %946 = vmatpush1.xpose.msra.mxu0 0.0
  %947 = vmatprep.subr.mxu0 0.0
  %948 = vmatpush1.xpose.msra.mxu0 0.0
  %949 = vmatprep.subr.mxu0 %v27
  %950 = vmatpush1.xpose.msra.mxu0 %v26
  %951 = vmatprep.subr.mxu0 0.0
  %952 = vmatpush2.xpose.msra.mxu0 0.0
  %953 = vmatprep.subr.mxu0 0.0
  %954 = vmatpush2.xpose.msra.mxu0 0.0
  %955 = vmatprep.subr.mxu0 0.0
  %956 = vmatpush2.xpose.msra.mxu0 0.0
  %957 = vmatprep.subr.mxu0 0.0
  %958 = vmatpush2.xpose.msra.mxu0 0.0
  %959 = vmatprep.subr.mxu0 0.0
  %960 = vmatpush2.xpose.msra.mxu0 0.0
  %961 = vmatprep.subr.mxu0 0.0
  %962 = vmatpush2.xpose.msra.mxu0 0.0
  %963 = vmatprep.subr.mxu0 0.0
  %964 = vmatpush2.xpose.msra.mxu0 0.0
  %965 = vmatprep.subr.mxu0 0.0
  %966 = vmatpush2.xpose.msra.mxu0 0.0
  %967 = vmatprep.subr.mxu0 0.0
  %968 = vmatpush2.xpose.msra.mxu0 0.0
  %969 = vmatprep.subr.mxu0 0.0
  %970 = vmatpush2.xpose.msra.mxu0 0.0
  %971 = vmatprep.subr.mxu0 0.0
  %972 = vmatpush2.xpose.msra.mxu0 0.0
  %973 = vmatprep.subr.mxu0 0.0
  %974 = vmatpush2.xpose.msra.mxu0 0.0
  %975 = vmatprep.subr.mxu0 0.0
  %976 = vmatpush2.xpose.msra.mxu0 0.0
  %977 = vmatprep.subr.mxu0 0.0
  %978 = vmatpush2.xpose.msra.mxu0 0.0
  %979 = vmatprep.subr.mxu0 0.0
  %980 = vmatpush2.xpose.msra.mxu0 0.0
  %981 = vmatprep.subr.mxu0 0.0
  %982 = vmatpush2.xpose.msra.mxu0 0.0
  %983 = vmatprep.mubr.f32.mxu0 %v848
  %984 = vmatmul.mubr.f32.gmra.mxu0 %v847
  %v985 = vpop.f32.mrf.mxu0
  %v986 = vadd.f32 %v916, %v985
  %v987 = vpop.f32.mrf.mxu0
  %988 = vdwg.mxu0
  %v989 = vsel %vm666, %v986, 0.0
  %v990 = vrot.slane %v989, 4
  %v991 = vadd.f32 %v989, %v990
  %v992 = vrot.slane %v991, 2
  %v993 = vadd.f32 %v991, %v992
  %v994 = vrot.slane %v993, 1
  %v995 = vadd.f32 %v993, %v994
  %v996 = vmul.f32 %v995, %v674
  %v998 = vsel %vm666, %v996, 0
  %1000 = vmatprep.subr.mxu0 0.0
  %1001 = vmatpush1.msra.mxu0 0.0
  %1002 = vmatprep.subr.mxu0 0.0
  %1003 = vmatpush1.msra.mxu0 0.0
  %1004 = vmatprep.subr.mxu0 0.0
  %1005 = vmatpush1.msra.mxu0 0.0
  %1006 = vmatprep.subr.mxu0 0.0
  %1007 = vmatpush1.msra.mxu0 0.0
  %1008 = vmatprep.subr.mxu0 0.0
  %1009 = vmatpush1.msra.mxu0 0.0
  %1010 = vmatprep.subr.mxu0 0.0
  %1011 = vmatpush1.msra.mxu0 0.0
  %1012 = vmatprep.subr.mxu0 0.0
  %1013 = vmatpush1.msra.mxu0 0.0
  %1014 = vmatprep.subr.mxu0 0.0
  %1015 = vmatpush1.msra.mxu0 0.0
  %1016 = vmatprep.subr.mxu0 0.0
  %1017 = vmatpush1.msra.mxu0 0.0
  %1018 = vmatprep.subr.mxu0 0.0
  %1019 = vmatpush1.msra.mxu0 0.0
  %1020 = vmatprep.subr.mxu0 0.0
  %1021 = vmatpush1.msra.mxu0 0.0
  %1022 = vmatprep.subr.mxu0 0.0
  %1023 = vmatpush1.msra.mxu0 0.0
  %1024 = vmatprep.subr.mxu0 0.0
  %1025 = vmatpush1.msra.mxu0 0.0
  %1026 = vmatprep.subr.mxu0 0.0
  %1027 = vmatpush1.msra.mxu0 0.0
  %1028 = vmatprep.subr.mxu0 0.0
  %1029 = vmatpush1.msra.mxu0 0.0
  %1030 = vmatprep.subr.mxu0 %v25
  %1031 = vmatpush1.msra.mxu0 %v24
  %1032 = vmatprep.subr.mxu0 0.0
  %1033 = vmatpush2.msra.mxu0 0.0
  %1034 = vmatprep.subr.mxu0 0.0
  %1035 = vmatpush2.msra.mxu0 0.0
  %1036 = vmatprep.subr.mxu0 0.0
  %1037 = vmatpush2.msra.mxu0 0.0
  %1038 = vmatprep.subr.mxu0 0.0
  %1039 = vmatpush2.msra.mxu0 0.0
  %1040 = vmatprep.subr.mxu0 0.0
  %1041 = vmatpush2.msra.mxu0 0.0
  %1042 = vmatprep.subr.mxu0 0.0
  %1043 = vmatpush2.msra.mxu0 0.0
  %1044 = vmatprep.subr.mxu0 0.0
  %1045 = vmatpush2.msra.mxu0 0.0
  %1046 = vmatprep.subr.mxu0 0.0
  %1047 = vmatpush2.msra.mxu0 0.0
  %1048 = vmatprep.subr.mxu0 0.0
  %1049 = vmatpush2.msra.mxu0 0.0
  %1050 = vmatprep.subr.mxu0 0.0
  %1051 = vmatpush2.msra.mxu0 0.0
  %1052 = vmatprep.subr.mxu0 0.0
  %1053 = vmatpush2.msra.mxu0 0.0
  %1054 = vmatprep.subr.mxu0 0.0
  %1055 = vmatpush2.msra.mxu0 0.0
  %1056 = vmatprep.subr.mxu0 0.0
  %1057 = vmatpush2.msra.mxu0 0.0
  %1058 = vmatprep.subr.mxu0 0.0
  %1059 = vmatpush2.msra.mxu0 0.0
  %1060 = vmatprep.subr.mxu0 0.0
  %1061 = vmatpush2.msra.mxu0 0.0
  %1062 = vmatprep.subr.mxu0 0.0
  %1063 = vmatpush2.msra.mxu0 0.0
  %1064 = vmatprep.mubr.f32.mxu0 0.0
  %1065 = vmatmul.mubr.f32.gmra.mxu0 %v998
  %v1066 = vpop.f32.mrf.mxu0
  %v1067 = vadd.f32 0.0, %v1066
  %v1068 = vpop.f32.mrf.mxu0
  %v1069 = vadd.f32 0.0, %v1068
  %1070 = vdwg.mxu0
  %1071 = vmatprep.subr.mxu0 0.0
  %1072 = vmatpush1.msra.mxu0 0.0
  %1073 = vmatprep.subr.mxu0 0.0
  %1074 = vmatpush1.msra.mxu0 0.0
  %1075 = vmatprep.subr.mxu0 0.0
  %1076 = vmatpush1.msra.mxu0 0.0
  %1077 = vmatprep.subr.mxu0 0.0
  %1078 = vmatpush1.msra.mxu0 0.0
  %1079 = vmatprep.subr.mxu0 0.0
  %1080 = vmatpush1.msra.mxu0 0.0
  %1081 = vmatprep.subr.mxu0 0.0
  %1082 = vmatpush1.msra.mxu0 0.0
  %1083 = vmatprep.subr.mxu0 0.0
  %1084 = vmatpush1.msra.mxu0 0.0
  %1085 = vmatprep.subr.mxu0 0.0
  %1086 = vmatpush1.msra.mxu0 0.0
  %1087 = vmatprep.subr.mxu0 0.0
  %1088 = vmatpush1.msra.mxu0 0.0
  %1089 = vmatprep.subr.mxu0 0.0
  %1090 = vmatpush1.msra.mxu0 0.0
  %1091 = vmatprep.subr.mxu0 0.0
  %1092 = vmatpush1.msra.mxu0 0.0
  %1093 = vmatprep.subr.mxu0 0.0
  %1094 = vmatpush1.msra.mxu0 0.0
  %1095 = vmatprep.subr.mxu0 0.0
  %1096 = vmatpush1.msra.mxu0 0.0
  %1097 = vmatprep.subr.mxu0 0.0
  %1098 = vmatpush1.msra.mxu0 0.0
  %1099 = vmatprep.subr.mxu0 0.0
  %1100 = vmatpush1.msra.mxu0 0.0
  %1101 = vmatprep.subr.mxu0 %v27
  %1102 = vmatpush1.msra.mxu0 %v26
  %1103 = vmatprep.subr.mxu0 0.0
  %1104 = vmatpush2.msra.mxu0 0.0
  %1105 = vmatprep.subr.mxu0 0.0
  %1106 = vmatpush2.msra.mxu0 0.0
  %1107 = vmatprep.subr.mxu0 0.0
  %1108 = vmatpush2.msra.mxu0 0.0
  %1109 = vmatprep.subr.mxu0 0.0
  %1110 = vmatpush2.msra.mxu0 0.0
  %1111 = vmatprep.subr.mxu0 0.0
  %1112 = vmatpush2.msra.mxu0 0.0
  %1113 = vmatprep.subr.mxu0 0.0
  %1114 = vmatpush2.msra.mxu0 0.0
  %1115 = vmatprep.subr.mxu0 0.0
  %1116 = vmatpush2.msra.mxu0 0.0
  %1117 = vmatprep.subr.mxu0 0.0
  %1118 = vmatpush2.msra.mxu0 0.0
  %1119 = vmatprep.subr.mxu0 0.0
  %1120 = vmatpush2.msra.mxu0 0.0
  %1121 = vmatprep.subr.mxu0 0.0
  %1122 = vmatpush2.msra.mxu0 0.0
  %1123 = vmatprep.subr.mxu0 0.0
  %1124 = vmatpush2.msra.mxu0 0.0
  %1125 = vmatprep.subr.mxu0 0.0
  %1126 = vmatpush2.msra.mxu0 0.0
  %1127 = vmatprep.subr.mxu0 0.0
  %1128 = vmatpush2.msra.mxu0 0.0
  %1129 = vmatprep.subr.mxu0 0.0
  %1130 = vmatpush2.msra.mxu0 0.0
  %1131 = vmatprep.subr.mxu0 0.0
  %1132 = vmatpush2.msra.mxu0 0.0
  %1133 = vmatprep.subr.mxu0 0.0
  %1134 = vmatpush2.msra.mxu0 0.0
  %1135 = vmatprep.mubr.f32.mxu0 0.0
  %1136 = vmatmul.mubr.f32.gmra.mxu0 %v998
  %v1137 = vpop.f32.mrf.mxu0
  %v1138 = vadd.f32 0.0, %v1137
  %v1139 = vpop.f32.mrf.mxu0
  %v1140 = vadd.f32 0.0, %v1139
  %1141 = vdwg.mxu0
  %v1142 = vmul.f32 %v1067, 256.0
  %v1143 = vmul.f32 %v1069, 256.0
  %v1144 = vmul.f32 %v1138, 256.0
  %v1145 = vmul.f32 %v1140, 256.0
  %v1146 = vadd.f32 %v1142, 1e-05
  %v1147 = vadd.f32 %v1143, 1e-05
  %v1148 = vadd.f32 %v1144, 1e-05
  %v1149 = vadd.f32 %v1145, 1e-05
  %v1150 = vrsqrt.pop %v1146
  %v1151 = vrsqrt.pop %v1147
  %v1152 = vrsqrt.pop %v1148
  %v1153 = vrsqrt.pop %v1149
  %v1154 = vlaneseq
  %v1155 = vshrl.u32 %v1154, 7
  %v1156 = vsub.s32 0, %v1155
  %v1157 = vrot.slane %v1150, %v1156
  %v1158 = vlaneseq
  %v1159 = vshrl.u32 %v1158, 7
  %v1160 = vsub.s32 0, %v1159
  %v1161 = vrot.slane %v1151, %v1160
  %v1162 = vlaneseq
  %v1163 = vshrl.u32 %v1162, 7
  %v1164 = vsub.s32 0, %v1163
  %v1165 = vrot.slane %v1152, %v1164
  %v1166 = vlaneseq
  %v1167 = vshrl.u32 %v1166, 7
  %v1168 = vsub.s32 0, %v1167
  %v1169 = vrot.slane %v1153, %v1168
  %v1170 = vmul.f32 %v841, %v1157
  %v1171 = vmul.f32 %v842, %v1161
  %v1172 = vmul.f32 %v843, %v1165
  %v1173 = vmul.f32 %v844, %v1169
  %1174 = vset.pattern.permute.xlu0 1
  %1175 = vperm.xlu0 %1174, %v36
  %v1176 = vpop.permute.xlu0 %1175
  %v1178 = vmul.f32 %v1170, %v1176
  %v1179 = vmul.f32 %v1171, %v1176
  %v1180 = vmul.f32 %v1172, %v1176
  %v1181 = vmul.f32 %v1173, %v1176
  %1182 = vset.pattern.permute.xlu0 2
  %1183 = vperm.xlu0 %1182, %v36
  %v1184 = vpop.permute.xlu0 %1183
  %v1186 = vadd.f32 %v1178, %v1184
  %v1187 = vadd.f32 %v1179, %v1184
  %v1188 = vadd.f32 %v1180, %v1184
  %v1189 = vadd.f32 %v1181, %v1184
  %v1190 = vmax.f32 %v1186, 0.0
  %v1191 = vmax.f32 %v1187, 0.0
  %v1192 = vmax.f32 %v1188, 0.0
  %v1193 = vmax.f32 %v1189, 0.0
  %v1194 = vld [vmem:[%s3] sm:$0xf]
  %v1195 = vld [vmem:[%s3 + $0x4] sm:$0xf]
  %1196 = vrot.lane.b32.xlu0 %v1190, 17
  %v1197 = vpop.permute.xlu0 %1196
  %1198 = vrot.lane.b32.xlu0 %v1191, 17
  %v1199 = vpop.permute.xlu0 %1198
  %1200 = vrot.lane.b32.xlu0 %v1192, 17
  %v1201 = vpop.permute.xlu0 %1200
  %1202 = vrot.lane.b32.xlu0 %v1193, 17
  %v1203 = vpop.permute.xlu0 %1202
  %v1204 = vsel %vm57, %v1201, %v1203
  %v1205 = vsel %vm57, %v1199, %v1201
  %v1206 = vsel %vm57, %v1197, %v1199
  %v1207 = vsel %vm57, %v1203, %v1197
  %v1208 = vmul.f32 %v1207, %v65
  %v1209 = vmul.f32 %v1206, %v69
  %v1210 = vmul.f32 %v1205, %v73
  %v1211 = vmul.f32 %v1204, %v77
  %1212 = vrot.lane.b32.xlu0 %v1190, 16
  %v1213 = vpop.permute.xlu0 %1212
  %1214 = vrot.lane.b32.xlu0 %v1191, 16
  %v1215 = vpop.permute.xlu0 %1214
  %1216 = vrot.lane.b32.xlu0 %v1192, 16
  %v1217 = vpop.permute.xlu0 %1216
  %1218 = vrot.lane.b32.xlu0 %v1193, 16
  %v1219 = vpop.permute.xlu0 %1218
  %v1220 = vsel %vm90, %v1217, %v1219
  %v1221 = vsel %vm90, %v1215, %v1217
  %v1222 = vsel %vm90, %v1213, %v1215
  %v1223 = vsel %vm90, %v1219, %v1213
  %v1224 = vmul.f32 %v1223, %v98
  %v1225 = vmul.f32 %v1222, %v102
  %v1226 = vmul.f32 %v1221, %v106
  %v1227 = vmul.f32 %v1220, %v110
  %1228 = vrot.lane.b32.xlu0 %v1190, 15
  %v1229 = vpop.permute.xlu0 %1228
  %1230 = vrot.lane.b32.xlu0 %v1191, 15
  %v1231 = vpop.permute.xlu0 %1230
  %1232 = vrot.lane.b32.xlu0 %v1192, 15
  %v1233 = vpop.permute.xlu0 %1232
  %1234 = vrot.lane.b32.xlu0 %v1193, 15
  %v1235 = vpop.permute.xlu0 %1234
  %v1236 = vsel %vm123, %v1233, %v1235
  %v1237 = vsel %vm123, %v1231, %v1233
  %v1238 = vsel %vm123, %v1229, %v1231
  %v1239 = vsel %vm123, %v1235, %v1229
  %v1240 = vmul.f32 %v1239, %v131
  %v1241 = vmul.f32 %v1238, %v135
  %v1242 = vmul.f32 %v1237, %v139
  %v1243 = vmul.f32 %v1236, %v143
  %1244 = vrot.lane.b32.xlu0 %v1190, 1
  %v1245 = vpop.permute.xlu0 %1244
  %1246 = vrot.lane.b32.xlu0 %v1191, 1
  %v1247 = vpop.permute.xlu0 %1246
  %1248 = vrot.lane.b32.xlu0 %v1192, 1
  %v1249 = vpop.permute.xlu0 %1248
  %1250 = vrot.lane.b32.xlu0 %v1193, 1
  %v1251 = vpop.permute.xlu0 %1250
  %v1252 = vsel %vm156, %v1249, %v1251
  %v1253 = vsel %vm156, %v1247, %v1249
  %v1254 = vsel %vm156, %v1245, %v1247
  %v1255 = vsel %vm156, %v1251, %v1245
  %v1256 = vmul.f32 %v1255, %v164
  %v1257 = vmul.f32 %v1254, %v168
  %v1258 = vmul.f32 %v1253, %v172
  %v1259 = vmul.f32 %v1252, %v176
  %v1260 = vmul.f32 %v1190, %v184
  %v1261 = vmul.f32 %v1191, %v188
  %v1262 = vmul.f32 %v1192, %v192
  %v1263 = vmul.f32 %v1193, %v196
  %1264 = vrot.lane.b32.xlu0 %v1190, 127
  %v1265 = vpop.permute.xlu0 %1264
  %1266 = vrot.lane.b32.xlu0 %v1191, 127
  %v1267 = vpop.permute.xlu0 %1266
  %1268 = vrot.lane.b32.xlu0 %v1192, 127
  %v1269 = vpop.permute.xlu0 %1268
  %1270 = vrot.lane.b32.xlu0 %v1193, 127
  %v1271 = vpop.permute.xlu0 %1270
  %v1272 = vsel %vm215, %v1269, %v1271
  %v1273 = vsel %vm215, %v1267, %v1269
  %v1274 = vsel %vm215, %v1265, %v1267
  %v1275 = vsel %vm215, %v1271, %v1265
  %v1276 = vmul.f32 %v1274, %v223
  %v1277 = vmul.f32 %v1273, %v227
  %v1278 = vmul.f32 %v1272, %v231
  %v1279 = vmul.f32 %v1275, %v235
  %1280 = vrot.lane.b32.xlu0 %v1190, 113
  %v1281 = vpop.permute.xlu0 %1280
  %1282 = vrot.lane.b32.xlu0 %v1191, 113
  %v1283 = vpop.permute.xlu0 %1282
  %1284 = vrot.lane.b32.xlu0 %v1192, 113
  %v1285 = vpop.permute.xlu0 %1284
  %1286 = vrot.lane.b32.xlu0 %v1193, 113
  %v1287 = vpop.permute.xlu0 %1286
  %v1288 = vsel %vm248, %v1285, %v1287
  %v1289 = vsel %vm248, %v1283, %v1285
  %v1290 = vsel %vm248, %v1281, %v1283
  %v1291 = vsel %vm248, %v1287, %v1281
  %v1292 = vmul.f32 %v1290, %v256
  %v1293 = vmul.f32 %v1289, %v260
  %v1294 = vmul.f32 %v1288, %v264
  %v1295 = vmul.f32 %v1291, %v268
  %1296 = vrot.lane.b32.xlu0 %v1190, 112
  %v1297 = vpop.permute.xlu0 %1296
  %1298 = vrot.lane.b32.xlu0 %v1191, 112
  %v1299 = vpop.permute.xlu0 %1298
  %1300 = vrot.lane.b32.xlu0 %v1192, 112
  %v1301 = vpop.permute.xlu0 %1300
  %1302 = vrot.lane.b32.xlu0 %v1193, 112
  %v1303 = vpop.permute.xlu0 %1302
  %v1304 = vsel %vm281, %v1301, %v1303
  %v1305 = vsel %vm281, %v1299, %v1301
  %v1306 = vsel %vm281, %v1297, %v1299
  %v1307 = vsel %vm281, %v1303, %v1297
  %v1308 = vmul.f32 %v1306, %v289
  %v1309 = vmul.f32 %v1305, %v293
  %v1310 = vmul.f32 %v1304, %v297
  %v1311 = vmul.f32 %v1307, %v301
  %1312 = vrot.lane.b32.xlu0 %v1190, 111
  %v1313 = vpop.permute.xlu0 %1312
  %1314 = vrot.lane.b32.xlu0 %v1191, 111
  %v1315 = vpop.permute.xlu0 %1314
  %1316 = vrot.lane.b32.xlu0 %v1192, 111
  %v1317 = vpop.permute.xlu0 %1316
  %1318 = vrot.lane.b32.xlu0 %v1193, 111
  %v1319 = vpop.permute.xlu0 %1318
  %v1320 = vsel %vm314, %v1317, %v1319
  %v1321 = vsel %vm314, %v1315, %v1317
  %v1322 = vsel %vm314, %v1313, %v1315
  %v1323 = vsel %vm314, %v1319, %v1313
  %v1324 = vmul.f32 %v1322, %v322
  %v1325 = vmul.f32 %v1321, %v326
  %v1326 = vmul.f32 %v1320, %v330
  %v1327 = vmul.f32 %v1323, %v334
  %v1328 = vpack.c.bf16 %v1224, %v1208
  %v1329 = vpack.c.bf16 %v1225, %v1209
  %v1330 = vpack.c.bf16 %v1226, %v1210
  %v1331 = vpack.c.bf16 %v1227, %v1211
  %v1332 = vpack.c.bf16 %v1256, %v1240
  %v1333 = vpack.c.bf16 %v1257, %v1241
  %v1334 = vpack.c.bf16 %v1258, %v1242
  %v1335 = vpack.c.bf16 %v1259, %v1243
  %v1336 = vpack.c.bf16 %v1276, %v1260
  %v1337 = vpack.c.bf16 %v1277, %v1261
  %v1338 = vpack.c.bf16 %v1278, %v1262
  %v1339 = vpack.c.bf16 %v1279, %v1263
  %v1340 = vpack.c.bf16 %v1308, %v1292
  %v1341 = vpack.c.bf16 %v1309, %v1293
  %v1342 = vpack.c.bf16 %v1310, %v1294
  %v1343 = vpack.c.bf16 %v1311, %v1295
  %v1344 = vpack.c.bf16 %v1324, %v1324
  %v1345 = vpack.c.bf16 %v1325, %v1325
  %v1346 = vpack.c.bf16 %v1326, %v1326
  %v1347 = vpack.c.bf16 %v1327, %v1327
  %1348 = vset.pattern.permute.xlu0 3
  %1349 = vperm.xlu0 %1348, %v36
  %v1350 = vpop.permute.xlu0 %1349
  %1353 = vset.pattern.permute.xlu0 3
  %1354 = vperm.xlu0 %1353, %v37
  %v1355 = vpop.permute.xlu0 %1354
  %v1359 = vunpack.c.l.b16 %v1194
  %v1360 = vunpack.c.l.b16 %v1195
  %v1361 = vpack.c.b16 %v1360, %v1359
  %vm1362 = vcmask 588800
  %v1364 = vsel %vm1362, %v1361, 0
  %v1367 = vsel %vm393, %v1344, 0
  %v1370 = vsel %vm393, %v1345, 0
  %v1373 = vsel %vm393, %v1346, 0
  %v1376 = vsel %vm393, %v1347, 0
  %1378 = vmatprep.subr.bf16.mxu0 0
  %1379 = vmatpush1.bf16.msra.mxu0 0
  %1380 = vmatprep.subr.bf16.mxu0 0
  %1381 = vmatpush1.bf16.msra.mxu0 0
  %1382 = vmatprep.subr.bf16.mxu0 0
  %1383 = vmatpush1.bf16.msra.mxu0 0
  %1384 = vmatprep.subr.bf16.mxu0 %v1370
  %1385 = vmatpush1.bf16.msra.mxu0 %v1367
  %1386 = vmatprep.subr.bf16.mxu0 %v1341
  %1387 = vmatpush1.bf16.msra.mxu0 %v1340
  %1388 = vmatprep.subr.bf16.mxu0 %v1337
  %1389 = vmatpush1.bf16.msra.mxu0 %v1336
  %1390 = vmatprep.subr.bf16.mxu0 %v1333
  %1391 = vmatpush1.bf16.msra.mxu0 %v1332
  %1392 = vmatprep.subr.bf16.mxu0 %v1329
  %1393 = vmatpush1.bf16.msra.mxu0 %v1328
  %1394 = vmatprep.subr.bf16.mxu0 0
  %1395 = vmatpush2.bf16.msra.mxu0 0
  %1396 = vmatprep.subr.bf16.mxu0 0
  %1397 = vmatpush2.bf16.msra.mxu0 0
  %1398 = vmatprep.subr.bf16.mxu0 0
  %1399 = vmatpush2.bf16.msra.mxu0 0
  %1400 = vmatprep.subr.bf16.mxu0 0
  %1401 = vmatpush2.bf16.msra.mxu0 0
  %1402 = vmatprep.subr.bf16.mxu0 0
  %1403 = vmatpush2.bf16.msra.mxu0 0
  %1404 = vmatprep.subr.bf16.mxu0 0
  %1405 = vmatpush2.bf16.msra.mxu0 0
  %1406 = vmatprep.subr.bf16.mxu0 0
  %1407 = vmatpush2.bf16.msra.mxu0 0
  %1408 = vmatprep.subr.bf16.mxu0 0
  %1409 = vmatpush2.bf16.msra.mxu0 0
  %1410 = vmatprep.mubr.bf16.mxu0 0
  %1411 = vmatmul.mubr.bf16.gmra.mxu0 %v1364
  %v1412 = vpop.f32.mrf.mxu0
  %v1413 = vadd.f32 %v1350, %v1412
  %v1414 = vpop.f32.mrf.mxu0
  %v1415 = vadd.f32 %v1350, %v1414
  %v1416 = vpop.f32.mrf.mxu0
  %v1417 = vadd.f32 %v1355, %v1416
  %v1418 = vpop.f32.mrf.mxu0
  %v1419 = vadd.f32 %v1355, %v1418
  %1420 = vdwg.mxu0
  %1421 = vmatprep.subr.bf16.mxu0 0
  %1422 = vmatpush1.bf16.msra.mxu0 0
  %1423 = vmatprep.subr.bf16.mxu0 0
  %1424 = vmatpush1.bf16.msra.mxu0 0
  %1425 = vmatprep.subr.bf16.mxu0 0
  %1426 = vmatpush1.bf16.msra.mxu0 0
  %1427 = vmatprep.subr.bf16.mxu0 %v1376
  %1428 = vmatpush1.bf16.msra.mxu0 %v1373
  %1429 = vmatprep.subr.bf16.mxu0 %v1343
  %1430 = vmatpush1.bf16.msra.mxu0 %v1342
  %1431 = vmatprep.subr.bf16.mxu0 %v1339
  %1432 = vmatpush1.bf16.msra.mxu0 %v1338
  %1433 = vmatprep.subr.bf16.mxu0 %v1335
  %1434 = vmatpush1.bf16.msra.mxu0 %v1334
  %1435 = vmatprep.subr.bf16.mxu0 %v1331
  %1436 = vmatpush1.bf16.msra.mxu0 %v1330
  %1437 = vmatprep.subr.bf16.mxu0 0
  %1438 = vmatpush2.bf16.msra.mxu0 0
  %1439 = vmatprep.subr.bf16.mxu0 0
  %1440 = vmatpush2.bf16.msra.mxu0 0
  %1441 = vmatprep.subr.bf16.mxu0 0
  %1442 = vmatpush2.bf16.msra.mxu0 0
  %1443 = vmatprep.subr.bf16.mxu0 0
  %1444 = vmatpush2.bf16.msra.mxu0 0
  %1445 = vmatprep.subr.bf16.mxu0 0
  %1446 = vmatpush2.bf16.msra.mxu0 0
  %1447 = vmatprep.subr.bf16.mxu0 0
  %1448 = vmatpush2.bf16.msra.mxu0 0
  %1449 = vmatprep.subr.bf16.mxu0 0
  %1450 = vmatpush2.bf16.msra.mxu0 0
  %1451 = vmatprep.subr.bf16.mxu0 0
  %1452 = vmatpush2.bf16.msra.mxu0 0
  %1453 = vmatprep.mubr.bf16.mxu0 0
  %1454 = vmatmul.mubr.bf16.gmra.mxu0 %v1364
  %v1455 = vpop.f32.mrf.mxu0
  %v1456 = vadd.f32 %v1350, %v1455
  %v1457 = vpop.f32.mrf.mxu0
  %v1458 = vadd.f32 %v1350, %v1457
  %v1459 = vpop.f32.mrf.mxu0
  %v1460 = vadd.f32 %v1355, %v1459
  %v1461 = vpop.f32.mrf.mxu0
  %v1462 = vadd.f32 %v1355, %v1461
  %1463 = vdwg.mxu0
  %1464 = vmatprep.subr.mxu0 0.0
  %1465 = vmatpush1.xpose.msra.mxu0 0.0
  %1466 = vmatprep.subr.mxu0 0.0
  %1467 = vmatpush1.xpose.msra.mxu0 0.0
  %1468 = vmatprep.subr.mxu0 0.0
  %1469 = vmatpush1.xpose.msra.mxu0 0.0
  %1470 = vmatprep.subr.mxu0 0.0
  %1471 = vmatpush1.xpose.msra.mxu0 0.0
  %1472 = vmatprep.subr.mxu0 0.0
  %1473 = vmatpush1.xpose.msra.mxu0 0.0
  %1474 = vmatprep.subr.mxu0 0.0
  %1475 = vmatpush1.xpose.msra.mxu0 0.0
  %1476 = vmatprep.subr.mxu0 0.0
  %1477 = vmatpush1.xpose.msra.mxu0 0.0
  %1478 = vmatprep.subr.mxu0 0.0
  %1479 = vmatpush1.xpose.msra.mxu0 0.0
  %1480 = vmatprep.subr.mxu0 0.0
  %1481 = vmatpush1.xpose.msra.mxu0 0.0
  %1482 = vmatprep.subr.mxu0 0.0
  %1483 = vmatpush1.xpose.msra.mxu0 0.0
  %1484 = vmatprep.subr.mxu0 0.0
  %1485 = vmatpush1.xpose.msra.mxu0 0.0
  %1486 = vmatprep.subr.mxu0 0.0
  %1487 = vmatpush1.xpose.msra.mxu0 0.0
  %1488 = vmatprep.subr.mxu0 0.0
  %1489 = vmatpush1.xpose.msra.mxu0 0.0
  %1490 = vmatprep.subr.mxu0 0.0
  %1491 = vmatpush1.xpose.msra.mxu0 0.0
  %1492 = vmatprep.subr.mxu0 0.0
  %1493 = vmatpush1.xpose.msra.mxu0 0.0
  %1494 = vmatprep.subr.mxu0 %v25
  %1495 = vmatpush1.xpose.msra.mxu0 %v24
  %1496 = vmatprep.subr.mxu0 0.0
  %1497 = vmatpush2.xpose.msra.mxu0 0.0
  %1498 = vmatprep.subr.mxu0 0.0
  %1499 = vmatpush2.xpose.msra.mxu0 0.0
  %1500 = vmatprep.subr.mxu0 0.0
  %1501 = vmatpush2.xpose.msra.mxu0 0.0
  %1502 = vmatprep.subr.mxu0 0.0
  %1503 = vmatpush2.xpose.msra.mxu0 0.0
  %1504 = vmatprep.subr.mxu0 0.0
  %1505 = vmatpush2.xpose.msra.mxu0 0.0
  %1506 = vmatprep.subr.mxu0 0.0
  %1507 = vmatpush2.xpose.msra.mxu0 0.0
  %1508 = vmatprep.subr.mxu0 0.0
  %1509 = vmatpush2.xpose.msra.mxu0 0.0
  %1510 = vmatprep.subr.mxu0 0.0
  %1511 = vmatpush2.xpose.msra.mxu0 0.0
  %1512 = vmatprep.subr.mxu0 0.0
  %1513 = vmatpush2.xpose.msra.mxu0 0.0
  %1514 = vmatprep.subr.mxu0 0.0
  %1515 = vmatpush2.xpose.msra.mxu0 0.0
  %1516 = vmatprep.subr.mxu0 0.0
  %1517 = vmatpush2.xpose.msra.mxu0 0.0
  %1518 = vmatprep.subr.mxu0 0.0
  %1519 = vmatpush2.xpose.msra.mxu0 0.0
  %1520 = vmatprep.subr.mxu0 0.0
  %1521 = vmatpush2.xpose.msra.mxu0 0.0
  %1522 = vmatprep.subr.mxu0 0.0
  %1523 = vmatpush2.xpose.msra.mxu0 0.0
  %1524 = vmatprep.subr.mxu0 0.0
  %1525 = vmatpush2.xpose.msra.mxu0 0.0
  %1526 = vmatprep.subr.mxu0 0.0
  %1527 = vmatpush2.xpose.msra.mxu0 0.0
  %1528 = vmatprep.mubr.f32.mxu0 %v1415
  %1529 = vmatmul.mubr.f32.gmra.mxu0 %v1413
  %v1530 = vpop.f32.mrf.mxu0
  %v1531 = vadd.f32 0.0, %v1530
  %v1532 = vpop.f32.mrf.mxu0
  %1533 = vmatprep.mubr.f32.mxu0 %v1419
  %1534 = vmatmul.mubr.f32.gmra.mxu0 %v1417
  %v1535 = vpop.f32.mrf.mxu0
  %v1536 = vadd.f32 0.0, %v1535
  %v1537 = vpop.f32.mrf.mxu0
  %1538 = vdwg.mxu0
  %1539 = vmatprep.subr.mxu0 0.0
  %1540 = vmatpush1.xpose.msra.mxu0 0.0
  %1541 = vmatprep.subr.mxu0 0.0
  %1542 = vmatpush1.xpose.msra.mxu0 0.0
  %1543 = vmatprep.subr.mxu0 0.0
  %1544 = vmatpush1.xpose.msra.mxu0 0.0
  %1545 = vmatprep.subr.mxu0 0.0
  %1546 = vmatpush1.xpose.msra.mxu0 0.0
  %1547 = vmatprep.subr.mxu0 0.0
  %1548 = vmatpush1.xpose.msra.mxu0 0.0
  %1549 = vmatprep.subr.mxu0 0.0
  %1550 = vmatpush1.xpose.msra.mxu0 0.0
  %1551 = vmatprep.subr.mxu0 0.0
  %1552 = vmatpush1.xpose.msra.mxu0 0.0
  %1553 = vmatprep.subr.mxu0 0.0
  %1554 = vmatpush1.xpose.msra.mxu0 0.0
  %1555 = vmatprep.subr.mxu0 0.0
  %1556 = vmatpush1.xpose.msra.mxu0 0.0
  %1557 = vmatprep.subr.mxu0 0.0
  %1558 = vmatpush1.xpose.msra.mxu0 0.0
  %1559 = vmatprep.subr.mxu0 0.0
  %1560 = vmatpush1.xpose.msra.mxu0 0.0
  %1561 = vmatprep.subr.mxu0 0.0
  %1562 = vmatpush1.xpose.msra.mxu0 0.0
  %1563 = vmatprep.subr.mxu0 0.0
  %1564 = vmatpush1.xpose.msra.mxu0 0.0
  %1565 = vmatprep.subr.mxu0 0.0
  %1566 = vmatpush1.xpose.msra.mxu0 0.0
  %1567 = vmatprep.subr.mxu0 0.0
  %1568 = vmatpush1.xpose.msra.mxu0 0.0
  %1569 = vmatprep.subr.mxu0 %v27
  %1570 = vmatpush1.xpose.msra.mxu0 %v26
  %1571 = vmatprep.subr.mxu0 0.0
  %1572 = vmatpush2.xpose.msra.mxu0 0.0
  %1573 = vmatprep.subr.mxu0 0.0
  %1574 = vmatpush2.xpose.msra.mxu0 0.0
  %1575 = vmatprep.subr.mxu0 0.0
  %1576 = vmatpush2.xpose.msra.mxu0 0.0
  %1577 = vmatprep.subr.mxu0 0.0
  %1578 = vmatpush2.xpose.msra.mxu0 0.0
  %1579 = vmatprep.subr.mxu0 0.0
  %1580 = vmatpush2.xpose.msra.mxu0 0.0
  %1581 = vmatprep.subr.mxu0 0.0
  %1582 = vmatpush2.xpose.msra.mxu0 0.0
  %1583 = vmatprep.subr.mxu0 0.0
  %1584 = vmatpush2.xpose.msra.mxu0 0.0
  %1585 = vmatprep.subr.mxu0 0.0
  %1586 = vmatpush2.xpose.msra.mxu0 0.0
  %1587 = vmatprep.subr.mxu0 0.0
  %1588 = vmatpush2.xpose.msra.mxu0 0.0
  %1589 = vmatprep.subr.mxu0 0.0
  %1590 = vmatpush2.xpose.msra.mxu0 0.0
  %1591 = vmatprep.subr.mxu0 0.0
  %1592 = vmatpush2.xpose.msra.mxu0 0.0
  %1593 = vmatprep.subr.mxu0 0.0
  %1594 = vmatpush2.xpose.msra.mxu0 0.0
  %1595 = vmatprep.subr.mxu0 0.0
  %1596 = vmatpush2.xpose.msra.mxu0 0.0
  %1597 = vmatprep.subr.mxu0 0.0
  %1598 = vmatpush2.xpose.msra.mxu0 0.0
  %1599 = vmatprep.subr.mxu0 0.0
  %1600 = vmatpush2.xpose.msra.mxu0 0.0
  %1601 = vmatprep.subr.mxu0 0.0
  %1602 = vmatpush2.xpose.msra.mxu0 0.0
  %1603 = vmatprep.mubr.f32.mxu0 %v1458
  %1604 = vmatmul.mubr.f32.gmra.mxu0 %v1456
  %v1605 = vpop.f32.mrf.mxu0
  %v1606 = vadd.f32 %v1531, %v1605
  %v1607 = vpop.f32.mrf.mxu0
  %1608 = vmatprep.mubr.f32.mxu0 %v1462
  %1609 = vmatmul.mubr.f32.gmra.mxu0 %v1460
  %v1610 = vpop.f32.mrf.mxu0
  %v1611 = vadd.f32 %v1536, %v1610
  %v1612 = vpop.f32.mrf.mxu0
  %1613 = vdwg.mxu0
  %v1614 = vsel %vm666, %v1606, 0.0
  %v1615 = vsel %vm666, %v1611, 0.0
  %v1616 = vadd.f32 %v1614, %v1615
  %v1617 = vrot.slane %v1616, 4
  %v1618 = vadd.f32 %v1616, %v1617
  %v1619 = vrot.slane %v1618, 2
  %v1620 = vadd.f32 %v1618, %v1619
  %v1621 = vrot.slane %v1620, 1
  %v1622 = vadd.f32 %v1620, %v1621
  %v1623 = vrcp.pop 16.0
  %v1624 = vmul.f32 %v1622, %v1623
  %v1626 = vsel %vm666, %v1624, 0
  %1628 = vmatprep.subr.mxu0 0.0
  %1629 = vmatpush1.msra.mxu0 0.0
  %1630 = vmatprep.subr.mxu0 0.0
  %1631 = vmatpush1.msra.mxu0 0.0
  %1632 = vmatprep.subr.mxu0 0.0
  %1633 = vmatpush1.msra.mxu0 0.0
  %1634 = vmatprep.subr.mxu0 0.0
  %1635 = vmatpush1.msra.mxu0 0.0
  %1636 = vmatprep.subr.mxu0 0.0
  %1637 = vmatpush1.msra.mxu0 0.0
  %1638 = vmatprep.subr.mxu0 0.0
  %1639 = vmatpush1.msra.mxu0 0.0
  %1640 = vmatprep.subr.mxu0 0.0
  %1641 = vmatpush1.msra.mxu0 0.0
  %1642 = vmatprep.subr.mxu0 0.0
  %1643 = vmatpush1.msra.mxu0 0.0
  %1644 = vmatprep.subr.mxu0 0.0
  %1645 = vmatpush1.msra.mxu0 0.0
  %1646 = vmatprep.subr.mxu0 0.0
  %1647 = vmatpush1.msra.mxu0 0.0
  %1648 = vmatprep.subr.mxu0 0.0
  %1649 = vmatpush1.msra.mxu0 0.0
  %1650 = vmatprep.subr.mxu0 0.0
  %1651 = vmatpush1.msra.mxu0 0.0
  %1652 = vmatprep.subr.mxu0 0.0
  %1653 = vmatpush1.msra.mxu0 0.0
  %1654 = vmatprep.subr.mxu0 0.0
  %1655 = vmatpush1.msra.mxu0 0.0
  %1656 = vmatprep.subr.mxu0 0.0
  %1657 = vmatpush1.msra.mxu0 0.0
  %1658 = vmatprep.subr.mxu0 %v25
  %1659 = vmatpush1.msra.mxu0 %v24
  %1660 = vmatprep.subr.mxu0 0.0
  %1661 = vmatpush2.msra.mxu0 0.0
  %1662 = vmatprep.subr.mxu0 0.0
  %1663 = vmatpush2.msra.mxu0 0.0
  %1664 = vmatprep.subr.mxu0 0.0
  %1665 = vmatpush2.msra.mxu0 0.0
  %1666 = vmatprep.subr.mxu0 0.0
  %1667 = vmatpush2.msra.mxu0 0.0
  %1668 = vmatprep.subr.mxu0 0.0
  %1669 = vmatpush2.msra.mxu0 0.0
  %1670 = vmatprep.subr.mxu0 0.0
  %1671 = vmatpush2.msra.mxu0 0.0
  %1672 = vmatprep.subr.mxu0 0.0
  %1673 = vmatpush2.msra.mxu0 0.0
  %1674 = vmatprep.subr.mxu0 0.0
  %1675 = vmatpush2.msra.mxu0 0.0
  %1676 = vmatprep.subr.mxu0 0.0
  %1677 = vmatpush2.msra.mxu0 0.0
  %1678 = vmatprep.subr.mxu0 0.0
  %1679 = vmatpush2.msra.mxu0 0.0
  %1680 = vmatprep.subr.mxu0 0.0
  %1681 = vmatpush2.msra.mxu0 0.0
  %1682 = vmatprep.subr.mxu0 0.0
  %1683 = vmatpush2.msra.mxu0 0.0
  %1684 = vmatprep.subr.mxu0 0.0
  %1685 = vmatpush2.msra.mxu0 0.0
  %1686 = vmatprep.subr.mxu0 0.0
  %1687 = vmatpush2.msra.mxu0 0.0
  %1688 = vmatprep.subr.mxu0 0.0
  %1689 = vmatpush2.msra.mxu0 0.0
  %1690 = vmatprep.subr.mxu0 0.0
  %1691 = vmatpush2.msra.mxu0 0.0
  %1692 = vmatprep.mubr.f32.mxu0 0.0
  %1693 = vmatmul.mubr.f32.gmra.mxu0 %v1626
  %v1694 = vpop.f32.mrf.mxu0
  %v1695 = vadd.f32 0.0, %v1694
  %v1696 = vpop.f32.mrf.mxu0
  %v1697 = vadd.f32 0.0, %v1696
  %1698 = vdwg.mxu0
  %1699 = vmatprep.subr.mxu0 0.0
  %1700 = vmatpush1.msra.mxu0 0.0
  %1701 = vmatprep.subr.mxu0 0.0
  %1702 = vmatpush1.msra.mxu0 0.0
  %1703 = vmatprep.subr.mxu0 0.0
  %1704 = vmatpush1.msra.mxu0 0.0
  %1705 = vmatprep.subr.mxu0 0.0
  %1706 = vmatpush1.msra.mxu0 0.0
  %1707 = vmatprep.subr.mxu0 0.0
  %1708 = vmatpush1.msra.mxu0 0.0
  %1709 = vmatprep.subr.mxu0 0.0
  %1710 = vmatpush1.msra.mxu0 0.0
  %1711 = vmatprep.subr.mxu0 0.0
  %1712 = vmatpush1.msra.mxu0 0.0
  %1713 = vmatprep.subr.mxu0 0.0
  %1714 = vmatpush1.msra.mxu0 0.0
  %1715 = vmatprep.subr.mxu0 0.0
  %1716 = vmatpush1.msra.mxu0 0.0
  %1717 = vmatprep.subr.mxu0 0.0
  %1718 = vmatpush1.msra.mxu0 0.0
  %1719 = vmatprep.subr.mxu0 0.0
  %1720 = vmatpush1.msra.mxu0 0.0
  %1721 = vmatprep.subr.mxu0 0.0
  %1722 = vmatpush1.msra.mxu0 0.0
  %1723 = vmatprep.subr.mxu0 0.0
  %1724 = vmatpush1.msra.mxu0 0.0
  %1725 = vmatprep.subr.mxu0 0.0
  %1726 = vmatpush1.msra.mxu0 0.0
  %1727 = vmatprep.subr.mxu0 0.0
  %1728 = vmatpush1.msra.mxu0 0.0
  %1729 = vmatprep.subr.mxu0 %v27
  %1730 = vmatpush1.msra.mxu0 %v26
  %1731 = vmatprep.subr.mxu0 0.0
  %1732 = vmatpush2.msra.mxu0 0.0
  %1733 = vmatprep.subr.mxu0 0.0
  %1734 = vmatpush2.msra.mxu0 0.0
  %1735 = vmatprep.subr.mxu0 0.0
  %1736 = vmatpush2.msra.mxu0 0.0
  %1737 = vmatprep.subr.mxu0 0.0
  %1738 = vmatpush2.msra.mxu0 0.0
  %1739 = vmatprep.subr.mxu0 0.0
  %1740 = vmatpush2.msra.mxu0 0.0
  %1741 = vmatprep.subr.mxu0 0.0
  %1742 = vmatpush2.msra.mxu0 0.0
  %1743 = vmatprep.subr.mxu0 0.0
  %1744 = vmatpush2.msra.mxu0 0.0
  %1745 = vmatprep.subr.mxu0 0.0
  %1746 = vmatpush2.msra.mxu0 0.0
  %1747 = vmatprep.subr.mxu0 0.0
  %1748 = vmatpush2.msra.mxu0 0.0
  %1749 = vmatprep.subr.mxu0 0.0
  %1750 = vmatpush2.msra.mxu0 0.0
  %1751 = vmatprep.subr.mxu0 0.0
  %1752 = vmatpush2.msra.mxu0 0.0
  %1753 = vmatprep.subr.mxu0 0.0
  %1754 = vmatpush2.msra.mxu0 0.0
  %1755 = vmatprep.subr.mxu0 0.0
  %1756 = vmatpush2.msra.mxu0 0.0
  %1757 = vmatprep.subr.mxu0 0.0
  %1758 = vmatpush2.msra.mxu0 0.0
  %1759 = vmatprep.subr.mxu0 0.0
  %1760 = vmatpush2.msra.mxu0 0.0
  %1761 = vmatprep.subr.mxu0 0.0
  %1762 = vmatpush2.msra.mxu0 0.0
  %1763 = vmatprep.mubr.f32.mxu0 0.0
  %1764 = vmatmul.mubr.f32.gmra.mxu0 %v1626
  %v1765 = vpop.f32.mrf.mxu0
  %v1766 = vadd.f32 0.0, %v1765
  %v1767 = vpop.f32.mrf.mxu0
  %v1768 = vadd.f32 0.0, %v1767
  %1769 = vdwg.mxu0
  %v1770 = vmul.f32 %v1695, 256.0
  %v1771 = vmul.f32 %v1697, 256.0
  %v1772 = vmul.f32 %v1766, 256.0
  %v1773 = vmul.f32 %v1768, 256.0
  %v1774 = vlaneseq
  %v1775 = vshrl.u32 %v1774, 7
  %v1776 = vsub.s32 0, %v1775
  %v1777 = vrot.slane %v1770, %v1776
  %v1778 = vlaneseq
  %v1779 = vshrl.u32 %v1778, 7
  %v1780 = vsub.s32 0, %v1779
  %v1781 = vrot.slane %v1771, %v1780
  %v1782 = vlaneseq
  %v1783 = vshrl.u32 %v1782, 7
  %v1784 = vsub.s32 0, %v1783
  %v1785 = vrot.slane %v1772, %v1784
  %v1786 = vlaneseq
  %v1787 = vshrl.u32 %v1786, 7
  %v1788 = vsub.s32 0, %v1787
  %v1789 = vrot.slane %v1773, %v1788
  %v1790 = vsub.f32 %v1413, %v1777
  %v1791 = vsub.f32 %v1415, %v1781
  %v1792 = vsub.f32 %v1456, %v1785
  %v1793 = vsub.f32 %v1458, %v1789
  %v1794 = vsub.f32 %v1417, %v1777
  %v1795 = vsub.f32 %v1419, %v1781
  %v1796 = vsub.f32 %v1460, %v1785
  %v1797 = vsub.f32 %v1462, %v1789
  %v1798 = vmul.f32 %v1790, %v1790
  %v1799 = vmul.f32 %v1791, %v1791
  %v1800 = vmul.f32 %v1792, %v1792
  %v1801 = vmul.f32 %v1793, %v1793
  %v1802 = vmul.f32 %v1794, %v1794
  %v1803 = vmul.f32 %v1795, %v1795
  %v1804 = vmul.f32 %v1796, %v1796
  %v1805 = vmul.f32 %v1797, %v1797
  %1806 = vmatprep.subr.mxu0 0.0
  %1807 = vmatpush1.xpose.msra.mxu0 0.0
  %1808 = vmatprep.subr.mxu0 0.0
  %1809 = vmatpush1.xpose.msra.mxu0 0.0
  %1810 = vmatprep.subr.mxu0 0.0
  %1811 = vmatpush1.xpose.msra.mxu0 0.0
  %1812 = vmatprep.subr.mxu0 0.0
  %1813 = vmatpush1.xpose.msra.mxu0 0.0
  %1814 = vmatprep.subr.mxu0 0.0
  %1815 = vmatpush1.xpose.msra.mxu0 0.0
  %1816 = vmatprep.subr.mxu0 0.0
  %1817 = vmatpush1.xpose.msra.mxu0 0.0
  %1818 = vmatprep.subr.mxu0 0.0
  %1819 = vmatpush1.xpose.msra.mxu0 0.0
  %1820 = vmatprep.subr.mxu0 0.0
  %1821 = vmatpush1.xpose.msra.mxu0 0.0
  %1822 = vmatprep.subr.mxu0 0.0
  %1823 = vmatpush1.xpose.msra.mxu0 0.0
  %1824 = vmatprep.subr.mxu0 0.0
  %1825 = vmatpush1.xpose.msra.mxu0 0.0
  %1826 = vmatprep.subr.mxu0 0.0
  %1827 = vmatpush1.xpose.msra.mxu0 0.0
  %1828 = vmatprep.subr.mxu0 0.0
  %1829 = vmatpush1.xpose.msra.mxu0 0.0
  %1830 = vmatprep.subr.mxu0 0.0
  %1831 = vmatpush1.xpose.msra.mxu0 0.0
  %1832 = vmatprep.subr.mxu0 0.0
  %1833 = vmatpush1.xpose.msra.mxu0 0.0
  %1834 = vmatprep.subr.mxu0 0.0
  %1835 = vmatpush1.xpose.msra.mxu0 0.0
  %1836 = vmatprep.subr.mxu0 %v25
  %1837 = vmatpush1.xpose.msra.mxu0 %v24
  %1838 = vmatprep.subr.mxu0 0.0
  %1839 = vmatpush2.xpose.msra.mxu0 0.0
  %1840 = vmatprep.subr.mxu0 0.0
  %1841 = vmatpush2.xpose.msra.mxu0 0.0
  %1842 = vmatprep.subr.mxu0 0.0
  %1843 = vmatpush2.xpose.msra.mxu0 0.0
  %1844 = vmatprep.subr.mxu0 0.0
  %1845 = vmatpush2.xpose.msra.mxu0 0.0
  %1846 = vmatprep.subr.mxu0 0.0
  %1847 = vmatpush2.xpose.msra.mxu0 0.0
  %1848 = vmatprep.subr.mxu0 0.0
  %1849 = vmatpush2.xpose.msra.mxu0 0.0
  %1850 = vmatprep.subr.mxu0 0.0
  %1851 = vmatpush2.xpose.msra.mxu0 0.0
  %1852 = vmatprep.subr.mxu0 0.0
  %1853 = vmatpush2.xpose.msra.mxu0 0.0
  %1854 = vmatprep.subr.mxu0 0.0
  %1855 = vmatpush2.xpose.msra.mxu0 0.0
  %1856 = vmatprep.subr.mxu0 0.0
  %1857 = vmatpush2.xpose.msra.mxu0 0.0
  %1858 = vmatprep.subr.mxu0 0.0
  %1859 = vmatpush2.xpose.msra.mxu0 0.0
  %1860 = vmatprep.subr.mxu0 0.0
  %1861 = vmatpush2.xpose.msra.mxu0 0.0
  %1862 = vmatprep.subr.mxu0 0.0
  %1863 = vmatpush2.xpose.msra.mxu0 0.0
  %1864 = vmatprep.subr.mxu0 0.0
  %1865 = vmatpush2.xpose.msra.mxu0 0.0
  %1866 = vmatprep.subr.mxu0 0.0
  %1867 = vmatpush2.xpose.msra.mxu0 0.0
  %1868 = vmatprep.subr.mxu0 0.0
  %1869 = vmatpush2.xpose.msra.mxu0 0.0
  %1870 = vmatprep.mubr.f32.mxu0 %v1799
  %1871 = vmatmul.mubr.f32.gmra.mxu0 %v1798
  %v1872 = vpop.f32.mrf.mxu0
  %v1873 = vadd.f32 0.0, %v1872
  %v1874 = vpop.f32.mrf.mxu0
  %1875 = vmatprep.mubr.f32.mxu0 %v1803
  %1876 = vmatmul.mubr.f32.gmra.mxu0 %v1802
  %v1877 = vpop.f32.mrf.mxu0
  %v1878 = vadd.f32 0.0, %v1877
  %v1879 = vpop.f32.mrf.mxu0
  %1880 = vdwg.mxu0
  %1881 = vmatprep.subr.mxu0 0.0
  %1882 = vmatpush1.xpose.msra.mxu0 0.0
  %1883 = vmatprep.subr.mxu0 0.0
  %1884 = vmatpush1.xpose.msra.mxu0 0.0
  %1885 = vmatprep.subr.mxu0 0.0
  %1886 = vmatpush1.xpose.msra.mxu0 0.0
  %1887 = vmatprep.subr.mxu0 0.0
  %1888 = vmatpush1.xpose.msra.mxu0 0.0
  %1889 = vmatprep.subr.mxu0 0.0
  %1890 = vmatpush1.xpose.msra.mxu0 0.0
  %1891 = vmatprep.subr.mxu0 0.0
  %1892 = vmatpush1.xpose.msra.mxu0 0.0
  %1893 = vmatprep.subr.mxu0 0.0
  %1894 = vmatpush1.xpose.msra.mxu0 0.0
  %1895 = vmatprep.subr.mxu0 0.0
  %1896 = vmatpush1.xpose.msra.mxu0 0.0
  %1897 = vmatprep.subr.mxu0 0.0
  %1898 = vmatpush1.xpose.msra.mxu0 0.0
  %1899 = vmatprep.subr.mxu0 0.0
  %1900 = vmatpush1.xpose.msra.mxu0 0.0
  %1901 = vmatprep.subr.mxu0 0.0
  %1902 = vmatpush1.xpose.msra.mxu0 0.0
  %1903 = vmatprep.subr.mxu0 0.0
  %1904 = vmatpush1.xpose.msra.mxu0 0.0
  %1905 = vmatprep.subr.mxu0 0.0
  %1906 = vmatpush1.xpose.msra.mxu0 0.0
  %1907 = vmatprep.subr.mxu0 0.0
  %1908 = vmatpush1.xpose.msra.mxu0 0.0
  %1909 = vmatprep.subr.mxu0 0.0
  %1910 = vmatpush1.xpose.msra.mxu0 0.0
  %1911 = vmatprep.subr.mxu0 %v27
  %1912 = vmatpush1.xpose.msra.mxu0 %v26
  %1913 = vmatprep.subr.mxu0 0.0
  %1914 = vmatpush2.xpose.msra.mxu0 0.0
  %1915 = vmatprep.subr.mxu0 0.0
  %1916 = vmatpush2.xpose.msra.mxu0 0.0
  %1917 = vmatprep.subr.mxu0 0.0
  %1918 = vmatpush2.xpose.msra.mxu0 0.0
  %1919 = vmatprep.subr.mxu0 0.0
  %1920 = vmatpush2.xpose.msra.mxu0 0.0
  %1921 = vmatprep.subr.mxu0 0.0
  %1922 = vmatpush2.xpose.msra.mxu0 0.0
  %1923 = vmatprep.subr.mxu0 0.0
  %1924 = vmatpush2.xpose.msra.mxu0 0.0
  %1925 = vmatprep.subr.mxu0 0.0
  %1926 = vmatpush2.xpose.msra.mxu0 0.0
  %1927 = vmatprep.subr.mxu0 0.0
  %1928 = vmatpush2.xpose.msra.mxu0 0.0
  %1929 = vmatprep.subr.mxu0 0.0
  %1930 = vmatpush2.xpose.msra.mxu0 0.0
  %1931 = vmatprep.subr.mxu0 0.0
  %1932 = vmatpush2.xpose.msra.mxu0 0.0
  %1933 = vmatprep.subr.mxu0 0.0
  %1934 = vmatpush2.xpose.msra.mxu0 0.0
  %1935 = vmatprep.subr.mxu0 0.0
  %1936 = vmatpush2.xpose.msra.mxu0 0.0
  %1937 = vmatprep.subr.mxu0 0.0
  %1938 = vmatpush2.xpose.msra.mxu0 0.0
  %1939 = vmatprep.subr.mxu0 0.0
  %1940 = vmatpush2.xpose.msra.mxu0 0.0
  %1941 = vmatprep.subr.mxu0 0.0
  %1942 = vmatpush2.xpose.msra.mxu0 0.0
  %1943 = vmatprep.subr.mxu0 0.0
  %1944 = vmatpush2.xpose.msra.mxu0 0.0
  %1945 = vmatprep.mubr.f32.mxu0 %v1801
  %1946 = vmatmul.mubr.f32.gmra.mxu0 %v1800
  %v1947 = vpop.f32.mrf.mxu0
  %v1948 = vadd.f32 %v1873, %v1947
  %v1949 = vpop.f32.mrf.mxu0
  %1950 = vmatprep.mubr.f32.mxu0 %v1805
  %1951 = vmatmul.mubr.f32.gmra.mxu0 %v1804
  %v1952 = vpop.f32.mrf.mxu0
  %v1953 = vadd.f32 %v1878, %v1952
  %v1954 = vpop.f32.mrf.mxu0
  %1955 = vdwg.mxu0
  %v1956 = vsel %vm666, %v1948, 0.0
  %v1957 = vsel %vm666, %v1953, 0.0
  %v1958 = vadd.f32 %v1956, %v1957
  %v1959 = vrot.slane %v1958, 4
  %v1960 = vadd.f32 %v1958, %v1959
  %v1961 = vrot.slane %v1960, 2
  %v1962 = vadd.f32 %v1960, %v1961
  %v1963 = vrot.slane %v1962, 1
  %v1964 = vadd.f32 %v1962, %v1963
  %v1965 = vmul.f32 %v1964, %v1623
  %v1967 = vsel %vm666, %v1965, 0
  %1969 = vmatprep.subr.mxu0 0.0
  %1970 = vmatpush1.msra.mxu0 0.0
  %1971 = vmatprep.subr.mxu0 0.0
  %1972 = vmatpush1.msra.mxu0 0.0
  %1973 = vmatprep.subr.mxu0 0.0
  %1974 = vmatpush1.msra.mxu0 0.0
  %1975 = vmatprep.subr.mxu0 0.0
  %1976 = vmatpush1.msra.mxu0 0.0
  %1977 = vmatprep.subr.mxu0 0.0
  %1978 = vmatpush1.msra.mxu0 0.0
  %1979 = vmatprep.subr.mxu0 0.0
  %1980 = vmatpush1.msra.mxu0 0.0
  %1981 = vmatprep.subr.mxu0 0.0
  %1982 = vmatpush1.msra.mxu0 0.0
  %1983 = vmatprep.subr.mxu0 0.0
  %1984 = vmatpush1.msra.mxu0 0.0
  %1985 = vmatprep.subr.mxu0 0.0
  %1986 = vmatpush1.msra.mxu0 0.0
  %1987 = vmatprep.subr.mxu0 0.0
  %1988 = vmatpush1.msra.mxu0 0.0
  %1989 = vmatprep.subr.mxu0 0.0
  %1990 = vmatpush1.msra.mxu0 0.0
  %1991 = vmatprep.subr.mxu0 0.0
  %1992 = vmatpush1.msra.mxu0 0.0
  %1993 = vmatprep.subr.mxu0 0.0
  %1994 = vmatpush1.msra.mxu0 0.0
  %1995 = vmatprep.subr.mxu0 0.0
  %1996 = vmatpush1.msra.mxu0 0.0
  %1997 = vmatprep.subr.mxu0 0.0
  %1998 = vmatpush1.msra.mxu0 0.0
  %1999 = vmatprep.subr.mxu0 %v25
  %2000 = vmatpush1.msra.mxu0 %v24
  %2001 = vmatprep.subr.mxu0 0.0
  %2002 = vmatpush2.msra.mxu0 0.0
  %2003 = vmatprep.subr.mxu0 0.0
  %2004 = vmatpush2.msra.mxu0 0.0
  %2005 = vmatprep.subr.mxu0 0.0
  %2006 = vmatpush2.msra.mxu0 0.0
  %2007 = vmatprep.subr.mxu0 0.0
  %2008 = vmatpush2.msra.mxu0 0.0
  %2009 = vmatprep.subr.mxu0 0.0
  %2010 = vmatpush2.msra.mxu0 0.0
  %2011 = vmatprep.subr.mxu0 0.0
  %2012 = vmatpush2.msra.mxu0 0.0
  %2013 = vmatprep.subr.mxu0 0.0
  %2014 = vmatpush2.msra.mxu0 0.0
  %2015 = vmatprep.subr.mxu0 0.0
  %2016 = vmatpush2.msra.mxu0 0.0
  %2017 = vmatprep.subr.mxu0 0.0
  %2018 = vmatpush2.msra.mxu0 0.0
  %2019 = vmatprep.subr.mxu0 0.0
  %2020 = vmatpush2.msra.mxu0 0.0
  %2021 = vmatprep.subr.mxu0 0.0
  %2022 = vmatpush2.msra.mxu0 0.0
  %2023 = vmatprep.subr.mxu0 0.0
  %2024 = vmatpush2.msra.mxu0 0.0
  %2025 = vmatprep.subr.mxu0 0.0
  %2026 = vmatpush2.msra.mxu0 0.0
  %2027 = vmatprep.subr.mxu0 0.0
  %2028 = vmatpush2.msra.mxu0 0.0
  %2029 = vmatprep.subr.mxu0 0.0
  %2030 = vmatpush2.msra.mxu0 0.0
  %2031 = vmatprep.subr.mxu0 0.0
  %2032 = vmatpush2.msra.mxu0 0.0
  %2033 = vmatprep.mubr.f32.mxu0 0.0
  %2034 = vmatmul.mubr.f32.gmra.mxu0 %v1967
  %v2035 = vpop.f32.mrf.mxu0
  %v2036 = vadd.f32 0.0, %v2035
  %v2037 = vpop.f32.mrf.mxu0
  %v2038 = vadd.f32 0.0, %v2037
  %2039 = vdwg.mxu0
  %2040 = vmatprep.subr.mxu0 0.0
  %2041 = vmatpush1.msra.mxu0 0.0
  %2042 = vmatprep.subr.mxu0 0.0
  %2043 = vmatpush1.msra.mxu0 0.0
  %2044 = vmatprep.subr.mxu0 0.0
  %2045 = vmatpush1.msra.mxu0 0.0
  %2046 = vmatprep.subr.mxu0 0.0
  %2047 = vmatpush1.msra.mxu0 0.0
  %2048 = vmatprep.subr.mxu0 0.0
  %2049 = vmatpush1.msra.mxu0 0.0
  %2050 = vmatprep.subr.mxu0 0.0
  %2051 = vmatpush1.msra.mxu0 0.0
  %2052 = vmatprep.subr.mxu0 0.0
  %2053 = vmatpush1.msra.mxu0 0.0
  %2054 = vmatprep.subr.mxu0 0.0
  %2055 = vmatpush1.msra.mxu0 0.0
  %2056 = vmatprep.subr.mxu0 0.0
  %2057 = vmatpush1.msra.mxu0 0.0
  %2058 = vmatprep.subr.mxu0 0.0
  %2059 = vmatpush1.msra.mxu0 0.0
  %2060 = vmatprep.subr.mxu0 0.0
  %2061 = vmatpush1.msra.mxu0 0.0
  %2062 = vmatprep.subr.mxu0 0.0
  %2063 = vmatpush1.msra.mxu0 0.0
  %2064 = vmatprep.subr.mxu0 0.0
  %2065 = vmatpush1.msra.mxu0 0.0
  %2066 = vmatprep.subr.mxu0 0.0
  %2067 = vmatpush1.msra.mxu0 0.0
  %2068 = vmatprep.subr.mxu0 0.0
  %2069 = vmatpush1.msra.mxu0 0.0
  %2070 = vmatprep.subr.mxu0 %v27
  %2071 = vmatpush1.msra.mxu0 %v26
  %2072 = vmatprep.subr.mxu0 0.0
  %2073 = vmatpush2.msra.mxu0 0.0
  %2074 = vmatprep.subr.mxu0 0.0
  %2075 = vmatpush2.msra.mxu0 0.0
  %2076 = vmatprep.subr.mxu0 0.0
  %2077 = vmatpush2.msra.mxu0 0.0
  %2078 = vmatprep.subr.mxu0 0.0
  %2079 = vmatpush2.msra.mxu0 0.0
  %2080 = vmatprep.subr.mxu0 0.0
  %2081 = vmatpush2.msra.mxu0 0.0
  %2082 = vmatprep.subr.mxu0 0.0
  %2083 = vmatpush2.msra.mxu0 0.0
  %2084 = vmatprep.subr.mxu0 0.0
  %2085 = vmatpush2.msra.mxu0 0.0
  %2086 = vmatprep.subr.mxu0 0.0
  %2087 = vmatpush2.msra.mxu0 0.0
  %2088 = vmatprep.subr.mxu0 0.0
  %2089 = vmatpush2.msra.mxu0 0.0
  %2090 = vmatprep.subr.mxu0 0.0
  %2091 = vmatpush2.msra.mxu0 0.0
  %2092 = vmatprep.subr.mxu0 0.0
  %2093 = vmatpush2.msra.mxu0 0.0
  %2094 = vmatprep.subr.mxu0 0.0
  %2095 = vmatpush2.msra.mxu0 0.0
  %2096 = vmatprep.subr.mxu0 0.0
  %2097 = vmatpush2.msra.mxu0 0.0
  %2098 = vmatprep.subr.mxu0 0.0
  %2099 = vmatpush2.msra.mxu0 0.0
  %2100 = vmatprep.subr.mxu0 0.0
  %2101 = vmatpush2.msra.mxu0 0.0
  %2102 = vmatprep.subr.mxu0 0.0
  %2103 = vmatpush2.msra.mxu0 0.0
  %2104 = vmatprep.mubr.f32.mxu0 0.0
  %2105 = vmatmul.mubr.f32.gmra.mxu0 %v1967
  %v2106 = vpop.f32.mrf.mxu0
  %v2107 = vadd.f32 0.0, %v2106
  %v2108 = vpop.f32.mrf.mxu0
  %v2109 = vadd.f32 0.0, %v2108
  %2110 = vdwg.mxu0
  %v2111 = vmul.f32 %v2036, 256.0
  %v2112 = vmul.f32 %v2038, 256.0
  %v2113 = vmul.f32 %v2107, 256.0
  %v2114 = vmul.f32 %v2109, 256.0
  %v2115 = vadd.f32 %v2111, 1e-05
  %v2116 = vadd.f32 %v2112, 1e-05
  %v2117 = vadd.f32 %v2113, 1e-05
  %v2118 = vadd.f32 %v2114, 1e-05
  %v2119 = vrsqrt.pop %v2115
  %v2120 = vrsqrt.pop %v2116
  %v2121 = vrsqrt.pop %v2117
  %v2122 = vrsqrt.pop %v2118
  %v2123 = vlaneseq
  %v2124 = vshrl.u32 %v2123, 7
  %v2125 = vsub.s32 0, %v2124
  %v2126 = vrot.slane %v2119, %v2125
  %v2127 = vlaneseq
  %v2128 = vshrl.u32 %v2127, 7
  %v2129 = vsub.s32 0, %v2128
  %v2130 = vrot.slane %v2120, %v2129
  %v2131 = vlaneseq
  %v2132 = vshrl.u32 %v2131, 7
  %v2133 = vsub.s32 0, %v2132
  %v2134 = vrot.slane %v2121, %v2133
  %v2135 = vlaneseq
  %v2136 = vshrl.u32 %v2135, 7
  %v2137 = vsub.s32 0, %v2136
  %v2138 = vrot.slane %v2122, %v2137
  %v2139 = vmul.f32 %v1790, %v2126
  %v2140 = vmul.f32 %v1791, %v2130
  %v2141 = vmul.f32 %v1792, %v2134
  %v2142 = vmul.f32 %v1793, %v2138
  %v2143 = vmul.f32 %v1794, %v2126
  %v2144 = vmul.f32 %v1795, %v2130
  %v2145 = vmul.f32 %v1796, %v2134
  %v2146 = vmul.f32 %v1797, %v2138
  %2147 = vset.pattern.permute.xlu0 4
  %2148 = vperm.xlu0 %2147, %v36
  %v2149 = vpop.permute.xlu0 %2148
  %2151 = vset.pattern.permute.xlu0 4
  %2152 = vperm.xlu0 %2151, %v37
  %v2153 = vpop.permute.xlu0 %2152
  %v2155 = vmul.f32 %v2139, %v2149
  %v2156 = vmul.f32 %v2140, %v2149
  %v2157 = vmul.f32 %v2141, %v2149
  %v2158 = vmul.f32 %v2142, %v2149
  %v2159 = vmul.f32 %v2143, %v2153
  %v2160 = vmul.f32 %v2144, %v2153
  %v2161 = vmul.f32 %v2145, %v2153
  %v2162 = vmul.f32 %v2146, %v2153
  %2163 = vset.pattern.permute.xlu0 5
  %2164 = vperm.xlu0 %2163, %v36
  %v2165 = vpop.permute.xlu0 %2164
  %2167 = vset.pattern.permute.xlu0 5
  %2168 = vperm.xlu0 %2167, %v37
  %v2169 = vpop.permute.xlu0 %2168
  %v2171 = vadd.f32 %v2155, %v2165
  %v2172 = vadd.f32 %v2156, %v2165
  %v2173 = vadd.f32 %v2157, %v2165
  %v2174 = vadd.f32 %v2158, %v2165
  %v2175 = vadd.f32 %v2159, %v2169
  %v2176 = vadd.f32 %v2160, %v2169
  %v2177 = vadd.f32 %v2161, %v2169
  %v2178 = vadd.f32 %v2162, %v2169
  %v2179 = vmax.f32 %v2171, 0.0
  %v2180 = vmax.f32 %v2172, 0.0
  %v2181 = vmax.f32 %v2173, 0.0
  %v2182 = vmax.f32 %v2174, 0.0
  %v2183 = vmax.f32 %v2175, 0.0
  %v2184 = vmax.f32 %v2176, 0.0
  %v2185 = vmax.f32 %v2177, 0.0
  %v2186 = vmax.f32 %v2178, 0.0
  %2187 = vmatprep.subr.mxu0 0.0
  %2188 = vmatpush1.xpose.msra.mxu0 0.0
  %2189 = vmatprep.subr.mxu0 0.0
  %2190 = vmatpush1.xpose.msra.mxu0 0.0
  %2191 = vmatprep.subr.mxu0 0.0
  %2192 = vmatpush1.xpose.msra.mxu0 0.0
  %2193 = vmatprep.subr.mxu0 0.0
  %2194 = vmatpush1.xpose.msra.mxu0 0.0
  %2195 = vmatprep.subr.mxu0 0.0
  %2196 = vmatpush1.xpose.msra.mxu0 0.0
  %2197 = vmatprep.subr.mxu0 0.0
  %2198 = vmatpush1.xpose.msra.mxu0 0.0
  %2199 = vmatprep.subr.mxu0 0.0
  %2200 = vmatpush1.xpose.msra.mxu0 0.0
  %2201 = vmatprep.subr.mxu0 0.0
  %2202 = vmatpush1.xpose.msra.mxu0 0.0
  %2203 = vmatprep.subr.mxu0 0.0
  %2204 = vmatpush1.xpose.msra.mxu0 0.0
  %2205 = vmatprep.subr.mxu0 0.0
  %2206 = vmatpush1.xpose.msra.mxu0 0.0
  %2207 = vmatprep.subr.mxu0 0.0
  %2208 = vmatpush1.xpose.msra.mxu0 0.0
  %2209 = vmatprep.subr.mxu0 0.0
  %2210 = vmatpush1.xpose.msra.mxu0 0.0
  %2211 = vmatprep.subr.mxu0 0.0
  %2212 = vmatpush1.xpose.msra.mxu0 0.0
  %2213 = vmatprep.subr.mxu0 0.0
  %2214 = vmatpush1.xpose.msra.mxu0 0.0
  %2215 = vmatprep.subr.mxu0 %v2184
  %2216 = vmatpush1.xpose.msra.mxu0 %v2183
  %2217 = vmatprep.subr.mxu0 %v2180
  %2218 = vmatpush1.xpose.msra.mxu0 %v2179
  %2219 = vmatprep.subr.mxu0 0.0
  %2220 = vmatpush2.xpose.msra.mxu0 0.0
  %2221 = vmatprep.subr.mxu0 0.0
  %2222 = vmatpush2.xpose.msra.mxu0 0.0
  %2223 = vmatprep.subr.mxu0 0.0
  %2224 = vmatpush2.xpose.msra.mxu0 0.0
  %2225 = vmatprep.subr.mxu0 0.0
  %2226 = vmatpush2.xpose.msra.mxu0 0.0
  %2227 = vmatprep.subr.mxu0 0.0
  %2228 = vmatpush2.xpose.msra.mxu0 0.0
  %2229 = vmatprep.subr.mxu0 0.0
  %2230 = vmatpush2.xpose.msra.mxu0 0.0
  %2231 = vmatprep.subr.mxu0 0.0
  %2232 = vmatpush2.xpose.msra.mxu0 0.0
  %2233 = vmatprep.subr.mxu0 0.0
  %2234 = vmatpush2.xpose.msra.mxu0 0.0
  %2235 = vmatprep.subr.mxu0 0.0
  %2236 = vmatpush2.xpose.msra.mxu0 0.0
  %2237 = vmatprep.subr.mxu0 0.0
  %2238 = vmatpush2.xpose.msra.mxu0 0.0
  %2239 = vmatprep.subr.mxu0 0.0
  %2240 = vmatpush2.xpose.msra.mxu0 0.0
  %2241 = vmatprep.subr.mxu0 0.0
  %2242 = vmatpush2.xpose.msra.mxu0 0.0
  %2243 = vmatprep.subr.mxu0 0.0
  %2244 = vmatpush2.xpose.msra.mxu0 0.0
  %2245 = vmatprep.subr.mxu0 0.0
  %2246 = vmatpush2.xpose.msra.mxu0 0.0
  %2247 = vmatprep.subr.mxu0 0.0
  %2248 = vmatpush2.xpose.msra.mxu0 0.0
  %2249 = vmatprep.subr.mxu0 0.0
  %2250 = vmatpush2.xpose.msra.mxu0 0.0
  %2251 = vmatprep.mubr.f32.mxu0 %v25
  %2252 = vmatmul.mubr.f32.gmra.mxu0 %v24
  %v2253 = vpop.f32.mrf.mxu0
  %v2254 = vadd.f32 0.0, %v2253
  %v2255 = vpop.f32.mrf.mxu0
  %2256 = vdwg.mxu0
  %2257 = vmatprep.subr.mxu0 0.0
  %2258 = vmatpush1.xpose.msra.mxu0 0.0
  %2259 = vmatprep.subr.mxu0 0.0
  %2260 = vmatpush1.xpose.msra.mxu0 0.0
  %2261 = vmatprep.subr.mxu0 0.0
  %2262 = vmatpush1.xpose.msra.mxu0 0.0
  %2263 = vmatprep.subr.mxu0 0.0
  %2264 = vmatpush1.xpose.msra.mxu0 0.0
  %2265 = vmatprep.subr.mxu0 0.0
  %2266 = vmatpush1.xpose.msra.mxu0 0.0
  %2267 = vmatprep.subr.mxu0 0.0
  %2268 = vmatpush1.xpose.msra.mxu0 0.0
  %2269 = vmatprep.subr.mxu0 0.0
  %2270 = vmatpush1.xpose.msra.mxu0 0.0
  %2271 = vmatprep.subr.mxu0 0.0
  %2272 = vmatpush1.xpose.msra.mxu0 0.0
  %2273 = vmatprep.subr.mxu0 0.0
  %2274 = vmatpush1.xpose.msra.mxu0 0.0
  %2275 = vmatprep.subr.mxu0 0.0
  %2276 = vmatpush1.xpose.msra.mxu0 0.0
  %2277 = vmatprep.subr.mxu0 0.0
  %2278 = vmatpush1.xpose.msra.mxu0 0.0
  %2279 = vmatprep.subr.mxu0 0.0
  %2280 = vmatpush1.xpose.msra.mxu0 0.0
  %2281 = vmatprep.subr.mxu0 0.0
  %2282 = vmatpush1.xpose.msra.mxu0 0.0
  %2283 = vmatprep.subr.mxu0 0.0
  %2284 = vmatpush1.xpose.msra.mxu0 0.0
  %2285 = vmatprep.subr.mxu0 %v2186
  %2286 = vmatpush1.xpose.msra.mxu0 %v2185
  %2287 = vmatprep.subr.mxu0 %v2182
  %2288 = vmatpush1.xpose.msra.mxu0 %v2181
  %2289 = vmatprep.subr.mxu0 0.0
  %2290 = vmatpush2.xpose.msra.mxu0 0.0
  %2291 = vmatprep.subr.mxu0 0.0
  %2292 = vmatpush2.xpose.msra.mxu0 0.0
  %2293 = vmatprep.subr.mxu0 0.0
  %2294 = vmatpush2.xpose.msra.mxu0 0.0
  %2295 = vmatprep.subr.mxu0 0.0
  %2296 = vmatpush2.xpose.msra.mxu0 0.0
  %2297 = vmatprep.subr.mxu0 0.0
  %2298 = vmatpush2.xpose.msra.mxu0 0.0
  %2299 = vmatprep.subr.mxu0 0.0
  %2300 = vmatpush2.xpose.msra.mxu0 0.0
  %2301 = vmatprep.subr.mxu0 0.0
  %2302 = vmatpush2.xpose.msra.mxu0 0.0
  %2303 = vmatprep.subr.mxu0 0.0
  %2304 = vmatpush2.xpose.msra.mxu0 0.0
  %2305 = vmatprep.subr.mxu0 0.0
  %2306 = vmatpush2.xpose.msra.mxu0 0.0
  %2307 = vmatprep.subr.mxu0 0.0
  %2308 = vmatpush2.xpose.msra.mxu0 0.0
  %2309 = vmatprep.subr.mxu0 0.0
  %2310 = vmatpush2.xpose.msra.mxu0 0.0
  %2311 = vmatprep.subr.mxu0 0.0
  %2312 = vmatpush2.xpose.msra.mxu0 0.0
  %2313 = vmatprep.subr.mxu0 0.0
  %2314 = vmatpush2.xpose.msra.mxu0 0.0
  %2315 = vmatprep.subr.mxu0 0.0
  %2316 = vmatpush2.xpose.msra.mxu0 0.0
  %2317 = vmatprep.subr.mxu0 0.0
  %2318 = vmatpush2.xpose.msra.mxu0 0.0
  %2319 = vmatprep.subr.mxu0 0.0
  %2320 = vmatpush2.xpose.msra.mxu0 0.0
  %2321 = vmatprep.mubr.f32.mxu0 %v27
  %2322 = vmatmul.mubr.f32.gmra.mxu0 %v26
  %v2323 = vpop.f32.mrf.mxu0
  %v2324 = vadd.f32 %v2254, %v2323
  %v2325 = vpop.f32.mrf.mxu0
  %2326 = vdwg.mxu0
  %v2327 = vld [vmem:[%s4] sm:$0xff]
  %v2328 = vld [vmem:[%s4 + $0x8] sm:$0xff]
  %v2329 = vld [vmem:[%s4 + $0x10] sm:$0x1]
  %v2330 = vlaneseq
  %v2331 = vshrl.u32 %v2330, 7
  %v2332 = vsub.s32 0, %v2331
  %v2333 = vrot.slane %v2329, %v2332
  %vm2334 = vcmask 130048
  %v2336 = vsel %vm2334, %v2324, 0
  %2338 = vmatprep.subr.mxu0 0.0
  %2339 = vmatpush1.msra.mxu0 0.0
  %2340 = vmatprep.subr.mxu0 0.0
  %2341 = vmatpush1.msra.mxu0 0.0
  %2342 = vmatprep.subr.mxu0 0.0
  %2343 = vmatpush1.msra.mxu0 0.0
  %2344 = vmatprep.subr.mxu0 0.0
  %2345 = vmatpush1.msra.mxu0 0.0
  %2346 = vmatprep.subr.mxu0 0.0
  %2347 = vmatpush1.msra.mxu0 0.0
  %2348 = vmatprep.subr.mxu0 0.0
  %2349 = vmatpush1.msra.mxu0 0.0
  %2350 = vmatprep.subr.mxu0 0.0
  %2351 = vmatpush1.msra.mxu0 0.0
  %2352 = vmatprep.subr.mxu0 0.0
  %2353 = vmatpush1.msra.mxu0 0.0
  %2354 = vmatprep.subr.mxu0 0.0
  %2355 = vmatpush1.msra.mxu0 0.0
  %2356 = vmatprep.subr.mxu0 0.0
  %2357 = vmatpush1.msra.mxu0 0.0
  %2358 = vmatprep.subr.mxu0 0.0
  %2359 = vmatpush1.msra.mxu0 0.0
  %2360 = vmatprep.subr.mxu0 0.0
  %2361 = vmatpush1.msra.mxu0 0.0
  %2362 = vmatprep.subr.mxu0 0.0
  %2363 = vmatpush1.msra.mxu0 0.0
  %2364 = vmatprep.subr.mxu0 0.0
  %2365 = vmatpush1.msra.mxu0 0.0
  %2366 = vmatprep.subr.mxu0 0.0
  %2367 = vmatpush1.msra.mxu0 %v2328
  %2368 = vmatprep.subr.mxu0 0.0
  %2369 = vmatpush1.msra.mxu0 %v2327
  %2370 = vmatprep.subr.mxu0 0.0
  %2371 = vmatpush2.msra.mxu0 0.0
  %2372 = vmatprep.subr.mxu0 0.0
  %2373 = vmatpush2.msra.mxu0 0.0
  %2374 = vmatprep.subr.mxu0 0.0
  %2375 = vmatpush2.msra.mxu0 0.0
  %2376 = vmatprep.subr.mxu0 0.0
  %2377 = vmatpush2.msra.mxu0 0.0
  %2378 = vmatprep.subr.mxu0 0.0
  %2379 = vmatpush2.msra.mxu0 0.0
  %2380 = vmatprep.subr.mxu0 0.0
  %2381 = vmatpush2.msra.mxu0 0.0
  %2382 = vmatprep.subr.mxu0 0.0
  %2383 = vmatpush2.msra.mxu0 0.0
  %2384 = vmatprep.subr.mxu0 0.0
  %2385 = vmatpush2.msra.mxu0 0.0
  %2386 = vmatprep.subr.mxu0 0.0
  %2387 = vmatpush2.msra.mxu0 0.0
  %2388 = vmatprep.subr.mxu0 0.0
  %2389 = vmatpush2.msra.mxu0 0.0
  %2390 = vmatprep.subr.mxu0 0.0
  %2391 = vmatpush2.msra.mxu0 0.0
  %2392 = vmatprep.subr.mxu0 0.0
  %2393 = vmatpush2.msra.mxu0 0.0
  %2394 = vmatprep.subr.mxu0 0.0
  %2395 = vmatpush2.msra.mxu0 0.0
  %2396 = vmatprep.subr.mxu0 0.0
  %2397 = vmatpush2.msra.mxu0 0.0
  %2398 = vmatprep.subr.mxu0 0.0
  %2399 = vmatpush2.msra.mxu0 0.0
  %2400 = vmatprep.subr.mxu0 0.0
  %2401 = vmatpush2.msra.mxu0 0.0
  %2402 = vmatprep.mubr.f32.mxu0 0.0
  %2403 = vmatmul.mubr.f32.gmra.mxu0 %v2336
  %v2404 = vpop.f32.mrf.mxu0
  %v2405 = vadd.f32 %v2333, %v2404
  %v2406 = vpop.f32.mrf.mxu0
  %2407 = vdwg.mxu0
  %2408 = vst [vmem:[%s6] sm:$0xff] %v2405
  // Predicated region
  $region26: #{single_submodel_forward.1} parent=0 // pred_check
    _
  $region27: #{single_submodel_forward.1} parent=0 // pred_check_branch
    %2410 = sbr.rel (0) target = $region29
  $region28: #{single_submodel_forward.1} parent=0 // pred_region
    _
  $region29: #{single_submodel_forward.1} parent=0 // pred_fallthru
    _
  // Predicated region
  $region30: #{single_submodel_forward.1} parent=0 // pred_check
    _
  $region31: #{single_submodel_forward.1} parent=0 // pred_check_branch
    %2412 = sbr.rel (0) target = $region33
  $region32: #{single_submodel_forward.1} parent=0 // pred_region
    _
  $region33: #{single_submodel_forward.1} parent=0 // pred_fallthru
    _

</llo_original>
